<compile_context>
chip_gen: v6e
topology: v6e:2x2x1
jax: 0.10.0
libtpu: 0.0.40
codegen_flags: <defaults>
</compile_context>

<pallas_src>
import math
from functools import partial

import jax
import jax.numpy as jnp
from jax.experimental import pallas as pl
from jax.experimental.pallas import tpu as pltpu


def _qkv_attention_kernel(q_ref, k_ref, v_ref, o_ref, *, ch):
    # Blocks are (TBH, C, T): heads on the leading (batch) axis, per-head channels
    # on sublanes, sequence on lanes.
    q = q_ref[...]
    k = k_ref[...]
    v = v_ref[...]

    # Apply the attention scale once: (1/sqrt(sqrt(C)))^2 == 1/sqrt(C).
    q = q * (1.0 / math.sqrt(ch))

    # One small (C x T per head) transpose so BOTH matmuls are in canonical MXU form.
    kt = jnp.swapaxes(k, 1, 2)                                   # (TBH, T_s, C)

    # scoresT[b, s, t] = sum_c k[b, c, s] * q[b, c, t]  -- one batched MXU matmul
    s = jnp.einsum('bsc,bct->bst', kt, q,
                   preferred_element_type=jnp.float32)           # (TBH, S, T) f32

    # f32 softmax over the key axis s (sublane axis), matching
    # torch.softmax(weight.float(), dim=-1).
    m = jnp.max(s, axis=1, keepdims=True)                        # (TBH, 1, T)
    e = jnp.exp(s - m)
    l = jnp.sum(e, axis=1, keepdims=True)                        # (TBH, 1, T)
    # Exact reciprocal of the small row-sum tensor, then one broadcast multiply
    # (cheaper than dividing the full TxT block).
    w = (e * (1.0 / l)).astype(v.dtype)                          # (TBH, S, T)

    # a[b, c, t] = sum_s v[b, c, s] * w[b, s, t]        -- one batched MXU matmul,
    # canonical layout: no transposes of the TxT weights or of the output.
    a = jnp.einsum('bcs,bst->bct', v, w,
                   preferred_element_type=jnp.float32)           # (TBH, C, T)

    o_ref[...] = a.astype(o_ref.dtype)


def _pick_block_heads(bh, ch, length, itemsize,
                      vmem_budget=20 * 1024 * 1024, max_block=32):
    """Largest head-block that divides B*H, fits a conservative VMEM budget,
    and leaves >= 2 grid steps when possible (v7x has 2 TensorCores)."""
    # Rough per-head VMEM: q/k/v/out tiles (double-buffered by the pipeline)
    # plus ~4x the f32 (T, T) score block for softmax intermediates.
    per_head = 4 * ch * length * itemsize * 2 + 4 * length * length * 4
    cap = max(1, min(max_block, vmem_budget // max(per_head, 1)))
    divisors = [d for d in range(1, bh + 1) if bh % d == 0 and d <= cap]
    preferred = [d for d in divisors if bh // d >= 2]
    pool = preferred or divisors or [1]
    return max(pool)


def _qkv_block_spec(tbh, ch, length, channel_block):
    def index_map(i):
        return (i, channel_block, 0)
    return pl.BlockSpec((tbh, ch, length), index_map)


def qkv_attention(qkv, num_heads, block_heads=None):
    """qkv: (B, 3*H*C, T) -> (B, H*C, T), matching QKVAttention.forward(qkv)."""
    bs, width, length = qkv.shape
    assert width % (3 * num_heads) == 0
    ch = width // (3 * num_heads)
    bh = bs * num_heads
    itemsize = jnp.dtype(qkv.dtype).itemsize

    # Same (free) reshape as the PyTorch module: head-major channel layout.
    qkv_r = qkv.reshape(bh, 3 * ch, length)

    # Channel axis is blocked by C so q/k/v arrive as separate aligned tiles.
    assert ch % 8 == 0, "per-head channel dim must be a multiple of 8 (sublane tile)"

    tbh = block_heads if block_heads is not None else _pick_block_heads(
        bh, ch, length, itemsize)
    assert bh % tbh == 0, (bh, tbh)
    grid = (bh // tbh,)

    kernel = partial(_qkv_attention_kernel, ch=ch)

    cost = pl.CostEstimate(
        flops=int(4 * bh * ch * length * length),          # q@k + w@v
        transcendentals=int(bh * length * length),         # exp in softmax
        bytes_accessed=int((qkv_r.size + bh * ch * length) * itemsize),
    )

    out = pl.pallas_call(
        kernel,
        out_shape=jax.ShapeDtypeStruct((bh, ch, length), qkv.dtype),
        grid_spec=pltpu.PrefetchScalarGridSpec(
            num_scalar_prefetch=0,
            grid=grid,
            in_specs=[
                _qkv_block_spec(tbh, ch, length, 0),   # Q tile
                _qkv_block_spec(tbh, ch, length, 1),   # K tile
                _qkv_block_spec(tbh, ch, length, 2),   # V tile
            ],
            out_specs=pl.BlockSpec((tbh, ch, length), lambda i: (i, 0, 0)),
        ),
        compiler_params=pltpu.CompilerParams(
            dimension_semantics=("parallel",),
            vmem_limit_bytes=32 * 1024 * 1024),
        cost_estimate=cost,
    )(qkv_r, qkv_r, qkv_r)

    return out.reshape(bs, num_heads * ch, length)


def qkv_attention_ref(qkv, num_heads):
    """Pure-JAX reference mirroring the PyTorch forward exactly (encoder_kv=None)."""
    bs, width, length = qkv.shape
    ch = width // (3 * num_heads)
    qkv_r = qkv.reshape(bs * num_heads, 3 * ch, length)
    q, k, v = qkv_r[:, :ch], qkv_r[:, ch:2 * ch], qkv_r[:, 2 * ch:]
    scale = 1.0 / math.sqrt(math.sqrt(ch))
    weight = jnp.einsum('bct,bcs->bts', q * scale, k * scale)
    weight = jax.nn.softmax(weight.astype(jnp.float32), axis=-1).astype(weight.dtype)
    a = jnp.einsum('bts,bcs->bct', weight, v)
    return a.reshape(bs, -1, length)


if __name__ == "__main__":
    # Small shapes consistent with the module: B=2, H=4, C=16 per head, T=128.
    bs, num_heads, ch, length = 2, 4, 16, 128
    width = 3 * num_heads * ch

    key = jax.random.PRNGKey(0)
    qkv = jax.random.normal(key, (bs, width, length), dtype=jnp.float32)

    out = qkv_attention(qkv, num_heads)
    out = jax.block_until_ready(out)

    ref = qkv_attention_ref(qkv, num_heads)
    assert out.shape == (bs, num_heads * ch, length), out.shape
    err = jnp.max(jnp.abs(out - ref))
    assert jnp.allclose(out, ref, atol=2e-5, rtol=2e-5), f"max abs err {err}"

    print("KERNEL_OK")
</pallas_src>

<mosaic_0001>
module attributes {stable_mosaic.version = 11 : i64} {
  func.func @_qkv_attention_kernel(%arg0: i32, %arg1: memref<4x16x128xf32, #tpu.memory_space<vmem>>, %arg2: memref<4x16x128xf32, #tpu.memory_space<vmem>>, %arg3: memref<4x16x128xf32, #tpu.memory_space<vmem>>, %arg4: memref<4x16x128xf32, #tpu.memory_space<vmem>>) attributes {dimension_semantics = [#tpu.dimension_semantics<parallel>], iteration_bounds = array<i64: 2>, scalar_prefetch = 0 : i64, scratch_operands = 0 : i64, tpu.core_type = #tpu.core_type<tc>, window_params = [{transform_indices = @transform_0, window_bounds = array<i64: 4, 16, 128>}, {transform_indices = @transform_1, window_bounds = array<i64: 4, 16, 128>}, {transform_indices = @transform_2, window_bounds = array<i64: 4, 16, 128>}, {transform_indices = @transform_3, window_bounds = array<i64: 4, 16, 128>}]} {
    %c0 = arith.constant 0 : index
    %c0_0 = arith.constant 0 : index
    %c0_1 = arith.constant 0 : index
    %0 = vector.load %arg1[%c0, %c0_0, %c0_1] : memref<4x16x128xf32, #tpu.memory_space<vmem>>, vector<4x16x128xf32>
    %c0_2 = arith.constant 0 : index
    %c0_3 = arith.constant 0 : index
    %c0_4 = arith.constant 0 : index
    %1 = vector.load %arg2[%c0_2, %c0_3, %c0_4] : memref<4x16x128xf32, #tpu.memory_space<vmem>>, vector<4x16x128xf32>
    %c0_5 = arith.constant 0 : index
    %c0_6 = arith.constant 0 : index
    %c0_7 = arith.constant 0 : index
    %2 = vector.load %arg3[%c0_5, %c0_6, %c0_7] : memref<4x16x128xf32, #tpu.memory_space<vmem>>, vector<4x16x128xf32>
    %cst = arith.constant 2.500000e-01 : f32
    %3 = vector.broadcast %cst : f32 to vector<4x16x128xf32>
    %4 = arith.mulf %0, %3 : vector<4x16x128xf32>
    %5 = tpu.transpose %1, [0, 2, 1] : vector<4x16x128xf32> -> vector<4x128x16xf32>
    "tpu.trace_start"() <{level = 10 : i32, message = "bsc,bct->bst"}> : () -> ()
    %cst_8 = arith.constant dense<0.000000e+00> : vector<4x128x128xf32>
    %6 = tpu.matmul %5, %4, %cst_8 {dimension_numbers = #tpu.dot_dimension_numbers<[2], [1], [1], [2], [0, 0, 0, 1, 1, 2], [0], [0]>} : vector<4x128x16xf32>, vector<4x16x128xf32>, vector<4x128x128xf32> -> vector<4x128x128xf32>
    "tpu.trace_stop"() : () -> ()
    %cst_9 = arith.constant dense<0xFF800000> : vector<4x128xf32>
    %7 = vector.multi_reduction <maximumf>, %6, %cst_9 [1] : vector<4x128x128xf32> to vector<4x128xf32>
    %8 = vector.shape_cast %7 : vector<4x128xf32> to vector<4x1x128xf32>
    %9 = vector.broadcast %8 : vector<4x1x128xf32> to vector<4x128x128xf32>
    %10 = arith.subf %6, %9 : vector<4x128x128xf32>
    %11 = math.exp %10 : vector<4x128x128xf32>
    %cst_10 = arith.constant dense<0.000000e+00> : vector<4x128xf32>
    %12 = vector.multi_reduction <add>, %11, %cst_10 [1] : vector<4x128x128xf32> to vector<4x128xf32>
    %13 = vector.shape_cast %12 : vector<4x128xf32> to vector<4x1x128xf32>
    %cst_11 = arith.constant 1.000000e+00 : f32
    %14 = vector.broadcast %cst_11 : f32 to vector<4x1x128xf32>
    %15 = arith.divf %14, %13 : vector<4x1x128xf32>
    %16 = vector.broadcast %15 : vector<4x1x128xf32> to vector<4x128x128xf32>
    %17 = arith.mulf %11, %16 : vector<4x128x128xf32>
    "tpu.trace_start"() <{level = 10 : i32, message = "bcs,bst->bct"}> : () -> ()
    %cst_12 = arith.constant dense<0.000000e+00> : vector<4x16x128xf32>
    %18 = tpu.matmul %2, %17, %cst_12 {dimension_numbers = #tpu.dot_dimension_numbers<[2], [1], [1], [2], [0, 0, 0, 1, 1, 2], [0], [0]>} : vector<4x16x128xf32>, vector<4x128x128xf32>, vector<4x16x128xf32> -> vector<4x16x128xf32>
    "tpu.trace_stop"() : () -> ()
    %c0_13 = arith.constant 0 : index
    %c0_14 = arith.constant 0 : index
    %c0_15 = arith.constant 0 : index
    %19 = vector.load %arg4[%c0_13, %c0_14, %c0_15] : memref<4x16x128xf32, #tpu.memory_space<vmem>>, vector<4x16x128xf32>
    tpu.vector_store %arg4[%c0_13, %c0_14, %c0_15], %18 {strides = array<i32>} : memref<4x16x128xf32, #tpu.memory_space<vmem>>, vector<4x16x128xf32>,
    return
  }
  func.func @transform_0(%arg0: i32) -> (i32, i32, i32) {
    %c0_i32 = arith.constant 0 : i32
    %c0_i32_0 = arith.constant 0 : i32
    %c0_i32_1 = arith.constant 0 : i32
    return %arg0, %c0_i32, %c0_i32_0 : i32, i32, i32
  }
  func.func @transform_1(%arg0: i32) -> (i32, i32, i32) {
    %c1_i32 = arith.constant 1 : i32
    %c0_i32 = arith.constant 0 : i32
    %c0_i32_0 = arith.constant 0 : i32
    return %arg0, %c1_i32, %c0_i32 : i32, i32, i32
  }
  func.func @transform_2(%arg0: i32) -> (i32, i32, i32) {
    %c2_i32 = arith.constant 2 : i32
    %c0_i32 = arith.constant 0 : i32
    %c0_i32_0 = arith.constant 0 : i32
    return %arg0, %c2_i32, %c0_i32 : i32, i32, i32
  }
  func.func @transform_3(%arg0: i32) -> (i32, i32, i32) {
    %c0_i32 = arith.constant 0 : i32
    %c0_i32_0 = arith.constant 0 : i32
    %c0_i32_1 = arith.constant 0 : i32
    return %arg0, %c0_i32, %c0_i32_0 : i32, i32, i32
  }
}

</mosaic_0001>

<llo_original>
// kernel: tpu_custom_call.1
$region0: #{tpu_custom_call.1}
  #allocation0 [shape = 'u32[]', space=smem, size = 0x4, offset = 0x4, fixed_abs, tag = 'smem constant byte address 0x4 - core index']
  #allocation1 [shape = 'u32[144,128]{1,0:T(1,128)}', space=vmem, size = 0x12000, scoped, tag = 'internal scratch']
  #allocation9 [shape = 's32[]', space=sflag, size = 0x4, offset = 0, fixed_abs, tag = 'sflag constant byte address 0x0 - dummy sync flag']
  #allocation11 [shape = 's32[]', space=sflag, size = 0x4, offset = 0, fixed_abs, tag = 'sflag constant byte address 0x0 - dummy sync flag']
  #allocation13 [shape = 's32[]', space=sflag, size = 0x4, offset = 0, fixed_abs, tag = 'sflag constant byte address 0x0 - dummy sync flag']
  %s0 = inlined_call_operand.hbm [shape: f32[8,48,128], index: 0, kind: input, shape index: {}]
  %s1 = inlined_call_operand.hbm [shape: f32[8,48,128], index: 1, kind: input, shape index: {}]
  %s2 = inlined_call_operand.hbm [shape: f32[8,48,128], index: 2, kind: input, shape index: {}]
  %s3 = inlined_call_operand.hbm [shape: f32[8,16,128], index: 3, kind: output, shape index: {}]
  %s4 = sld [smem:[#allocation0]]
  $region57: #{tpu_custom_call.1} parent=0
    _
  %s6 = ssub.s32 1, %s4
  %s7 = scalar_select 0, %s6, %s4
  $region1: #{tpu_custom_call.1} parent=0
    #allocation2 [shape = 'u8[65536]{0}', space=vmem, size = 0x10000, scoped, tag = 'input window, operand 0']
    #allocation3 [shape = 's32[2]{0}', space=sflag, size = 0x8, scoped, tag = 'scoped memory for tpu_custom_call.1']
    #allocation4 [shape = 's32[2]{0}', space=sflag, size = 0x8, scoped, tag = 'scoped memory for tpu_custom_call.1']
    #allocation5 [shape = 'u8[65536]{0}', space=vmem, size = 0x10000, scoped, tag = 'input window, operand 1']
    #allocation6 [shape = 's32[2]{0}', space=sflag, size = 0x8, scoped, tag = 'scoped memory for tpu_custom_call.1']
    #allocation7 [shape = 'u8[65536]{0}', space=vmem, size = 0x10000, scoped, tag = 'input window, operand 2']
    #allocation8 [shape = 'u8[65536]{0}', space=vmem, size = 0x10000, scoped, tag = 'output window, operand 0']
    %8 = vsyncpa [#allocation3], 0
    %s9 = scalar_lea.sflag [#allocation3], 1
    %10 = vsyncpa %s9, 0
    %11 = vsyncpa [#allocation6], 0
    %s12 = scalar_lea.sflag [#allocation6], 1
    %13 = vsyncpa %s12, 0
    %14 = vsyncpa [#allocation4], 0
    %s15 = scalar_lea.sflag [#allocation4], 1
    %16 = vsyncpa %s15, 0
    loop: start=0, step=1, limit=4
    $region2: #{tpu_custom_call.1} parent=1 // loop_pre_header
      _
    $region3: #{tpu_custom_call.1} parent=1 // loop_header
      %s18 = sphi 0, %s22
      %p19 = scmp.ge.s32.totalorder %s18, 4
      %s28 = sphi 0, %s30
      %s31 = sphi 0, %s28
      %s32 = sphi 0, %s31
      %s48 = sphi 0, %s32
      %s54 = sphi 0, %s56
      %s57 = sphi 0, %s54
      %s58 = sphi 0, %s57
      %s74 = sphi 0, %s58
      %s80 = sphi 0, %s82
      %s83 = sphi 0, %s80
      %s84 = sphi 0, %s83
      %s100 = sphi 0, %s84
      %s106 = sphi 0, %s108
      %s109 = sphi 0, %s106
      %s110 = sphi 0, %s109
      %s126 = sphi 0, %s110
    $region4: #{tpu_custom_call.1} parent=1 // loop_header_branch
      %21 = sbr.rel (%p19) target = $region8
    $region5: #{tpu_custom_call.1} parent=1 // loop_body
      %s23 = ssub.s32 %s18, 1
      %s24 = ssub.s32 %s18, 2
      %s25 = sadd.s32 %s18, 1
      %s26 = ssub.s32 %s18, %s25
      %p27 = scmp.eq.s32.totalorder %s26, 0
      %s29 = sadd.s32 %s28, 1
      %s30 = scalar_select %p27, %s28, %s29
      %p33 = pneg %p27
      %p34 = scmp.eq.s32.totalorder %s18, 1
      %p35 = por %p33, %p34
      %p36 = scmp.ne.s32.totalorder %s28, %s31
      %p37 = scmp.eq.s32.totalorder %s18, 0
      %p38 = por %p36, %p37
      %p39 = scmp.ne.s32.totalorder %s28, %s31
      %p40 = scmp.eq.s32.totalorder %s23, 1
      %p41 = por %p39, %p40
      %p42 = scmp.ne.s32.totalorder %s31, %s32
      %p43 = scmp.eq.s32.totalorder %s23, 0
      %p44 = por %p42, %p43
      %p45 = scmp.ne.s32.totalorder %s31, %s32
      %p46 = scmp.eq.s32.totalorder %s24, 1
      %p47 = por %p45, %p46
      %p49 = scmp.ne.s32.totalorder %s32, %s48
      %p50 = scmp.eq.s32.totalorder %s24, 0
      %p51 = por %p49, %p50
      %s52 = ssub.s32 %s18, %s25
      %p53 = scmp.eq.s32.totalorder %s52, 0
      %s55 = sadd.s32 %s54, 1
      %s56 = scalar_select %p53, %s54, %s55
      %p59 = pneg %p53
      %p60 = scmp.eq.s32.totalorder %s18, 1
      %p61 = por %p59, %p60
      %p62 = scmp.ne.s32.totalorder %s54, %s57
      %p63 = scmp.eq.s32.totalorder %s18, 0
      %p64 = por %p62, %p63
      %p65 = scmp.ne.s32.totalorder %s54, %s57
      %p66 = scmp.eq.s32.totalorder %s23, 1
      %p67 = por %p65, %p66
      %p68 = scmp.ne.s32.totalorder %s57, %s58
      %p69 = scmp.eq.s32.totalorder %s23, 0
      %p70 = por %p68, %p69
      %p71 = scmp.ne.s32.totalorder %s57, %s58
      %p72 = scmp.eq.s32.totalorder %s24, 1
      %p73 = por %p71, %p72
      %p75 = scmp.ne.s32.totalorder %s58, %s74
      %p76 = scmp.eq.s32.totalorder %s24, 0
      %p77 = por %p75, %p76
      %s78 = ssub.s32 %s18, %s25
      %p79 = scmp.eq.s32.totalorder %s78, 0
      %s81 = sadd.s32 %s80, 1
      %s82 = scalar_select %p79, %s80, %s81
      %p85 = pneg %p79
      %p86 = scmp.eq.s32.totalorder %s18, 1
      %p87 = por %p85, %p86
      %p88 = scmp.ne.s32.totalorder %s80, %s83
      %p89 = scmp.eq.s32.totalorder %s18, 0
      %p90 = por %p88, %p89
      %p91 = scmp.ne.s32.totalorder %s80, %s83
      %p92 = scmp.eq.s32.totalorder %s23, 1
      %p93 = por %p91, %p92
      %p94 = scmp.ne.s32.totalorder %s83, %s84
      %p95 = scmp.eq.s32.totalorder %s23, 0
      %p96 = por %p94, %p95
      %p97 = scmp.ne.s32.totalorder %s83, %s84
      %p98 = scmp.eq.s32.totalorder %s24, 1
      %p99 = por %p97, %p98
      %p101 = scmp.ne.s32.totalorder %s84, %s100
      %p102 = scmp.eq.s32.totalorder %s24, 0
      %p103 = por %p101, %p102
      %s104 = ssub.s32 %s18, %s25
      %p105 = scmp.eq.s32.totalorder %s104, 0
      %s107 = sadd.s32 %s106, 1
      %s108 = scalar_select %p105, %s106, %s107
      %p111 = pneg %p105
      %p112 = scmp.eq.s32.totalorder %s18, 1
      %p113 = por %p111, %p112
      %p114 = scmp.ne.s32.totalorder %s106, %s109
      %p115 = scmp.eq.s32.totalorder %s18, 0
      %p116 = por %p114, %p115
      %p117 = scmp.ne.s32.totalorder %s106, %s109
      %p118 = scmp.eq.s32.totalorder %s23, 1
      %p119 = por %p117, %p118
      %p120 = scmp.ne.s32.totalorder %s109, %s110
      %p121 = scmp.eq.s32.totalorder %s23, 0
      %p122 = por %p120, %p121
      %p123 = scmp.ne.s32.totalorder %s109, %s110
      %p124 = scmp.eq.s32.totalorder %s24, 1
      %p125 = por %p123, %p124
      %p127 = scmp.ne.s32.totalorder %s110, %s126
      %p128 = scmp.eq.s32.totalorder %s24, 0
      %p129 = por %p127, %p128
      %p130 = scmp.le.s32.totalorder 1, %s18
      %p131 = scmp.lt.s32.totalorder %s18, 3
      %p132 = pnand %p130, %p131
      %p133 = pneg %p132
      // Predicated region
      $region9: #{tpu_custom_call.1} parent=5 // pred_check
        _
      $region10: #{tpu_custom_call.1} parent=5 // pred_check_branch
        %135 = sbr.rel (%p132) target = $region12
      $region11: #{tpu_custom_call.1} parent=5 // pred_region
        %s136 = ssub.s32 %s18, 1
      $region12: #{tpu_custom_call.1} parent=5 // pred_fallthru
        _
      %p137 = scmp.lt.s32.totalorder %s18, 2
      // Predicated region
      $region13: #{tpu_custom_call.1} parent=5 // pred_check
        %p138 = pneg %p137
      $region14: #{tpu_custom_call.1} parent=5 // pred_check_branch
        %140 = sbr.rel (%p138) target = $region16
      $region15: #{tpu_custom_call.1} parent=5 // pred_region
        // Predicated region
        $region17: #{tpu_custom_call.1} parent=15 // pred_check
          %p141 = pneg %p38
        $region18: #{tpu_custom_call.1} parent=15 // pred_check_branch
          %143 = sbr.rel (%p141) target = $region20
        $region19: #{tpu_custom_call.1} parent=15 // pred_region
          #allocation10 [shape = 'u32[6]{0}', space=smem, size = 0x18, scoped, tag = 'DMA stride descriptor']
          %s144 = sand.u32 %s28, 1
          %s145 = scalar_lea.sflag [#allocation3], %s144
          %s146 = sand.u32 %s28, 1
          %s147 = smul.addr %s146, 64
          %s148 = scalar_lea.vmem [#allocation2], %s147
          %s149 = smul.u32 4, %s18
          %s151 = ssub.s32 1024, 1024
          %152 = vsyncadd %s145, %s151
          %s153 = smul.addr %s149, 6
          %s154 = smul.addr %s153, 128
          %s155 = scalar_lea.hbm %s0, %s154
          %s157 = sshll.u32 1, 14
          %s158 = sxor.u32 4294967295, %s157
          %s160 = sld [smem:[#allocation0]]
          %s161 = sadd.s32 2, %s160
          %s163 = sshll.u32 7, 26
          %s164 = sxor.u32 4294967295, %s163
          %s165 = sand.u32 0, %s164
          %s166 = sshll.u32 %s161, 26
          %s167 = sor.u32 %s165, %s166
          %s168 = sshll.u32 %s148, 4
          %s169 = int_to_ptr.vmem [resolvable:$true] %s168
          %175 = sst [smem:[#allocation10]] 768
          %s176 = scalar_lea.smem [#allocation10], 1
          %177 = sst [smem:[%s176]] 256
          %s178 = scalar_lea.smem [#allocation10], 2
          %179 = sst [smem:[%s178]] 2
          %s180 = scalar_lea.smem [#allocation10], 3
          %181 = sst [smem:[%s180]] 128
          %s182 = scalar_lea.smem [#allocation10], 4
          %183 = sst [smem:[%s182]] 128
          %s184 = scalar_lea.smem [#allocation10], 5
          %185 = sst [smem:[%s184]] 8
          %187 = dma.general %s155, 1024, %s169, %s145, 131072, [#allocation10], %s167, 0
        $region20: #{tpu_custom_call.1} parent=15 // pred_fallthru
          _
        // Predicated region
        $region21: #{tpu_custom_call.1} parent=15 // pred_check
          %p188 = pneg %p64
        $region22: #{tpu_custom_call.1} parent=15 // pred_check_branch
          %190 = sbr.rel (%p188) target = $region24
        $region23: #{tpu_custom_call.1} parent=15 // pred_region
          #allocation12 [shape = 'u32[6]{0}', space=smem, size = 0x18, scoped, tag = 'DMA stride descriptor']
          %s191 = sand.u32 %s18, 1
          %s192 = scalar_lea.sflag [#allocation6], %s191
          %s193 = sand.u32 %s54, 1
          %s194 = smul.addr %s193, 64
          %s195 = scalar_lea.vmem [#allocation5], %s194
          %s196 = smul.u32 4, %s18
          %s198 = ssub.s32 1024, 1024
          %199 = vsyncadd %s192, %s198
          %s200 = smul.addr %s196, 6
          %s201 = sadd.s32 2, %s200
          %s202 = smul.addr %s201, 128
          %s203 = scalar_lea.hbm %s1, %s202
          %s205 = sshll.u32 1, 14
          %s206 = sxor.u32 4294967295, %s205
          %s208 = sld [smem:[#allocation0]]
          %s209 = sadd.s32 2, %s208
          %s211 = sshll.u32 7, 26
          %s212 = sxor.u32 4294967295, %s211
          %s213 = sand.u32 0, %s212
          %s214 = sshll.u32 %s209, 26
          %s215 = sor.u32 %s213, %s214
          %s216 = sshll.u32 %s195, 4
          %s217 = int_to_ptr.vmem [resolvable:$true] %s216
          %223 = sst [smem:[#allocation12]] 768
          %s224 = scalar_lea.smem [#allocation12], 1
          %225 = sst [smem:[%s224]] 256
          %s226 = scalar_lea.smem [#allocation12], 2
          %227 = sst [smem:[%s226]] 2
          %s228 = scalar_lea.smem [#allocation12], 3
          %229 = sst [smem:[%s228]] 128
          %s230 = scalar_lea.smem [#allocation12], 4
          %231 = sst [smem:[%s230]] 128
          %s232 = scalar_lea.smem [#allocation12], 5
          %233 = sst [smem:[%s232]] 8
          %235 = dma.general %s203, 1024, %s217, %s192, 131072, [#allocation12], %s215, 0
        $region24: #{tpu_custom_call.1} parent=15 // pred_fallthru
          _
        // Predicated region
        $region25: #{tpu_custom_call.1} parent=15 // pred_check
          %p236 = pneg %p90
        $region26: #{tpu_custom_call.1} parent=15 // pred_check_branch
          %238 = sbr.rel (%p236) target = $region28
        $region27: #{tpu_custom_call.1} parent=15 // pred_region
          #allocation14 [shape = 'u32[6]{0}', space=smem, size = 0x18, scoped, tag = 'DMA stride descriptor']
          %s239 = sand.u32 %s18, 1
          %s240 = scalar_lea.sflag [#allocation6], %s239
          %s241 = sand.u32 %s80, 1
          %s242 = smul.addr %s241, 64
          %s243 = scalar_lea.vmem [#allocation7], %s242
          %s244 = smul.u32 4, %s18
          %s246 = ssub.s32 1024, 1024
          %247 = vsyncadd %s240, %s246
          %s248 = smul.addr %s244, 6
          %s249 = sadd.s32 4, %s248
          %s250 = smul.addr %s249, 128
          %s251 = scalar_lea.hbm %s2, %s250
          %s253 = sshll.u32 1, 14
          %s254 = sxor.u32 4294967295, %s253
          %s256 = sld [smem:[#allocation0]]
          %s257 = sadd.s32 2, %s256
          %s259 = sshll.u32 7, 26
          %s260 = sxor.u32 4294967295, %s259
          %s261 = sand.u32 0, %s260
          %s262 = sshll.u32 %s257, 26
          %s263 = sor.u32 %s261, %s262
          %s264 = sshll.u32 %s243, 4
          %s265 = int_to_ptr.vmem [resolvable:$true] %s264
          %271 = sst [smem:[#allocation14]] 768
          %s272 = scalar_lea.smem [#allocation14], 1
          %273 = sst [smem:[%s272]] 256
          %s274 = scalar_lea.smem [#allocation14], 2
          %275 = sst [smem:[%s274]] 2
          %s276 = scalar_lea.smem [#allocation14], 3
          %277 = sst [smem:[%s276]] 128
          %s278 = scalar_lea.smem [#allocation14], 4
          %279 = sst [smem:[%s278]] 128
          %s280 = scalar_lea.smem [#allocation14], 5
          %281 = sst [smem:[%s280]] 8
          %283 = dma.general %s251, 1024, %s265, %s240, 131072, [#allocation14], %s263, 0
        $region28: #{tpu_custom_call.1} parent=15 // pred_fallthru
          _
      $region16: #{tpu_custom_call.1} parent=5 // pred_fallthru
        _
      %p284 = scmp.le.s32.totalorder 1, %s18
      %p285 = scmp.lt.s32.totalorder %s18, 3
      %p286 = pnand %p284, %p285
      %p287 = pneg %p286
      // Predicated region
      $region29: #{tpu_custom_call.1} parent=5 // pred_check
        _
      $region30: #{tpu_custom_call.1} parent=5 // pred_check_branch
        %289 = sbr.rel (%p286) target = $region32
      $region31: #{tpu_custom_call.1} parent=5 // pred_region
        %s290 = ssub.s32 %s18, 1
        %s291 = sand.u32 %s31, 1
        %s292 = scalar_lea.sflag [#allocation3], %s291
        %s293 = sand.u32 %s31, 1
        %s294 = smul.addr %s293, 64
        %s295 = scalar_lea.vmem [#allocation2], %s294
        // Predicated region
        $region33: #{tpu_custom_call.1} parent=31 // pred_check
          %p296 = pneg %p44
        $region34: #{tpu_custom_call.1} parent=31 // pred_check_branch
          %298 = sbr.rel (%p296) target = $region36
        $region35: #{tpu_custom_call.1} parent=31 // pred_region
          %299 = dma.done %s292, 1024
        $region36: #{tpu_custom_call.1} parent=31 // pred_fallthru
          _
        %s300 = sand.u32 %s23, 1
        %s301 = scalar_lea.sflag [#allocation6], %s300
        %s302 = sand.u32 %s57, 1
        %s303 = smul.addr %s302, 64
        %s304 = scalar_lea.vmem [#allocation5], %s303
        // Predicated region
        $region37: #{tpu_custom_call.1} parent=31 // pred_check
          %p305 = pneg %p70
        $region38: #{tpu_custom_call.1} parent=31 // pred_check_branch
          %307 = sbr.rel (%p305) target = $region40
        $region39: #{tpu_custom_call.1} parent=31 // pred_region
          %308 = dma.done %s301, 1024
        $region40: #{tpu_custom_call.1} parent=31 // pred_fallthru
          _
        %s309 = sand.u32 %s23, 1
        %s310 = scalar_lea.sflag [#allocation6], %s309
        %s311 = sand.u32 %s83, 1
        %s312 = smul.addr %s311, 64
        %s313 = scalar_lea.vmem [#allocation7], %s312
        // Predicated region
        $region41: #{tpu_custom_call.1} parent=31 // pred_check
          %p314 = pneg %p96
        $region42: #{tpu_custom_call.1} parent=31 // pred_check_branch
          %316 = sbr.rel (%p314) target = $region44
        $region43: #{tpu_custom_call.1} parent=31 // pred_region
          %317 = dma.done %s310, 1024
        $region44: #{tpu_custom_call.1} parent=31 // pred_fallthru
          _
        %s318 = sand.u32 %s31, 1
        %s319 = scalar_lea.sflag [#allocation3], %s318
        %s320 = sand.u32 %s31, 1
        %s321 = smul.addr %s320, 64
        %s322 = scalar_lea.vmem [#allocation2], %s321
        %p323 = pneg %p44
        %p324 = pneg %p41
        %s325 = sand.u32 %s23, 1
        %s326 = scalar_lea.sflag [#allocation6], %s325
        %s327 = sand.u32 %s57, 1
        %s328 = smul.addr %s327, 64
        %s329 = scalar_lea.vmem [#allocation5], %s328
        %p330 = pneg %p70
        %p331 = pneg %p67
        %s332 = sand.u32 %s23, 1
        %s333 = scalar_lea.sflag [#allocation6], %s332
        %s334 = sand.u32 %s83, 1
        %s335 = smul.addr %s334, 64
        %s336 = scalar_lea.vmem [#allocation7], %s335
        %p337 = pneg %p96
        %p338 = pneg %p93
        %p339 = pneg %p122
        %p340 = pneg %p119
        %s341 = sand.u32 %s109, 1
        %s342 = scalar_lea.sflag [#allocation4], %s341
        %s343 = sand.u32 %s109, 1
        %s344 = smul.addr %s343, 64
        %s345 = scalar_lea.vmem [#allocation8], %s344
        %s346 = smul.u32 4, %s23
        %s347 = smul.u32 4, %s23
        %s348 = smul.u32 4, %s23
        %s349 = smul.u32 4, %s23
        %v350 = vld [vmem:[%s295] sm:$0xff]
        %v351 = vld [vmem:[%s295 + $0x8] sm:$0xff]
        %v352 = vld [vmem:[%s295 + $0x10] sm:$0xff]
        %v353 = vld [vmem:[%s295 + $0x18] sm:$0xff]
        %v354 = vld [vmem:[%s295 + $0x20] sm:$0xff]
        %v355 = vld [vmem:[%s295 + $0x28] sm:$0xff]
        %v356 = vld [vmem:[%s295 + $0x30] sm:$0xff]
        %v357 = vld [vmem:[%s295 + $0x38] sm:$0xff]
        %v358 = vld [vmem:[%s304] sm:$0xff]
        %v359 = vld [vmem:[%s304 + $0x8] sm:$0xff]
        %v360 = vld [vmem:[%s304 + $0x10] sm:$0xff]
        %v361 = vld [vmem:[%s304 + $0x18] sm:$0xff]
        %v362 = vld [vmem:[%s304 + $0x20] sm:$0xff]
        %v363 = vld [vmem:[%s304 + $0x28] sm:$0xff]
        %v364 = vld [vmem:[%s304 + $0x30] sm:$0xff]
        %v365 = vld [vmem:[%s304 + $0x38] sm:$0xff]
        %v366 = vld [vmem:[%s313] sm:$0xff]
        %v367 = vld [vmem:[%s313 + $0x8] sm:$0xff]
        %v368 = vld [vmem:[%s313 + $0x10] sm:$0xff]
        %v369 = vld [vmem:[%s313 + $0x18] sm:$0xff]
        %v370 = vld [vmem:[%s313 + $0x20] sm:$0xff]
        %v371 = vld [vmem:[%s313 + $0x28] sm:$0xff]
        %v372 = vld [vmem:[%s313 + $0x30] sm:$0xff]
        %v373 = vld [vmem:[%s313 + $0x38] sm:$0xff]
        %v374 = vmul.f32 %v350, 0.25
        %v375 = vmul.f32 %v351, 0.25
        %v376 = vmul.f32 %v352, 0.25
        %v377 = vmul.f32 %v353, 0.25
        %v378 = vmul.f32 %v354, 0.25
        %v379 = vmul.f32 %v355, 0.25
        %v380 = vmul.f32 %v356, 0.25
        %v381 = vmul.f32 %v357, 0.25
        %382 = vxpose.xlu0.b32.start [1/16] %v358, 128
        %383 = vxpose.xlu0.b32.cont [2/16] %v359, 128
        %384 = vxpose.xlu0.b32.cont [3/16] 0.0, 128
        %385 = vxpose.xlu0.b32.cont [4/16] 0.0, 128
        %386 = vxpose.xlu0.b32.cont [5/16] 0.0, 128
        %387 = vxpose.xlu0.b32.cont [6/16] 0.0, 128
        %388 = vxpose.xlu0.b32.cont [7/16] 0.0, 128
        %389 = vxpose.xlu0.b32.cont [8/16] 0.0, 128
        %390 = vxpose.xlu0.b32.cont [9/16] 0.0, 128
        %391 = vxpose.xlu0.b32.cont [10/16] 0.0, 128
        %392 = vxpose.xlu0.b32.cont [11/16] 0.0, 128
        %393 = vxpose.xlu0.b32.cont [12/16] 0.0, 128
        %394 = vxpose.xlu0.b32.cont [13/16] 0.0, 128
        %395 = vxpose.xlu0.b32.cont [14/16] 0.0, 128
        %396 = vxpose.xlu0.b32.cont [15/16] 0.0, 128
        %397 = vxpose.xlu0.b32.end [16/16] 0.0, 128
        %v398 = vpop.trf.xlu0
        %v399 = vpop.trf.xlu0
        %v400 = vpop.trf.xlu0
        %v401 = vpop.trf.xlu0
        %v402 = vpop.trf.xlu0
        %v403 = vpop.trf.xlu0
        %v404 = vpop.trf.xlu0
        %v405 = vpop.trf.xlu0
        %v406 = vpop.trf.xlu0
        %v407 = vpop.trf.xlu0
        %v408 = vpop.trf.xlu0
        %v409 = vpop.trf.xlu0
        %v410 = vpop.trf.xlu0
        %v411 = vpop.trf.xlu0
        %v412 = vpop.trf.xlu0
        %v413 = vpop.trf.xlu0
        %414 = vxpose.xlu0.b32.start [1/16] %v360, 128
        %415 = vxpose.xlu0.b32.cont [2/16] %v361, 128
        %416 = vxpose.xlu0.b32.cont [3/16] 0.0, 128
        %417 = vxpose.xlu0.b32.cont [4/16] 0.0, 128
        %418 = vxpose.xlu0.b32.cont [5/16] 0.0, 128
        %419 = vxpose.xlu0.b32.cont [6/16] 0.0, 128
        %420 = vxpose.xlu0.b32.cont [7/16] 0.0, 128
        %421 = vxpose.xlu0.b32.cont [8/16] 0.0, 128
        %422 = vxpose.xlu0.b32.cont [9/16] 0.0, 128
        %423 = vxpose.xlu0.b32.cont [10/16] 0.0, 128
        %424 = vxpose.xlu0.b32.cont [11/16] 0.0, 128
        %425 = vxpose.xlu0.b32.cont [12/16] 0.0, 128
        %426 = vxpose.xlu0.b32.cont [13/16] 0.0, 128
        %427 = vxpose.xlu0.b32.cont [14/16] 0.0, 128
        %428 = vxpose.xlu0.b32.cont [15/16] 0.0, 128
        %429 = vxpose.xlu0.b32.end [16/16] 0.0, 128
        %v430 = vpop.trf.xlu0
        %v431 = vpop.trf.xlu0
        %v432 = vpop.trf.xlu0
        %v433 = vpop.trf.xlu0
        %v434 = vpop.trf.xlu0
        %v435 = vpop.trf.xlu0
        %v436 = vpop.trf.xlu0
        %v437 = vpop.trf.xlu0
        %v438 = vpop.trf.xlu0
        %v439 = vpop.trf.xlu0
        %v440 = vpop.trf.xlu0
        %v441 = vpop.trf.xlu0
        %v442 = vpop.trf.xlu0
        %v443 = vpop.trf.xlu0
        %v444 = vpop.trf.xlu0
        %v445 = vpop.trf.xlu0
        %446 = vxpose.xlu0.b32.start [1/16] %v362, 128
        %447 = vxpose.xlu0.b32.cont [2/16] %v363, 128
        %448 = vxpose.xlu0.b32.cont [3/16] 0.0, 128
        %449 = vxpose.xlu0.b32.cont [4/16] 0.0, 128
        %450 = vxpose.xlu0.b32.cont [5/16] 0.0, 128
        %451 = vxpose.xlu0.b32.cont [6/16] 0.0, 128
        %452 = vxpose.xlu0.b32.cont [7/16] 0.0, 128
        %453 = vxpose.xlu0.b32.cont [8/16] 0.0, 128
        %454 = vxpose.xlu0.b32.cont [9/16] 0.0, 128
        %455 = vxpose.xlu0.b32.cont [10/16] 0.0, 128
        %456 = vxpose.xlu0.b32.cont [11/16] 0.0, 128
        %457 = vxpose.xlu0.b32.cont [12/16] 0.0, 128
        %458 = vxpose.xlu0.b32.cont [13/16] 0.0, 128
        %459 = vxpose.xlu0.b32.cont [14/16] 0.0, 128
        %460 = vxpose.xlu0.b32.cont [15/16] 0.0, 128
        %461 = vxpose.xlu0.b32.end [16/16] 0.0, 128
        %v462 = vpop.trf.xlu0
        %v463 = vpop.trf.xlu0
        %v464 = vpop.trf.xlu0
        %v465 = vpop.trf.xlu0
        %v466 = vpop.trf.xlu0
        %v467 = vpop.trf.xlu0
        %v468 = vpop.trf.xlu0
        %v469 = vpop.trf.xlu0
        %v470 = vpop.trf.xlu0
        %v471 = vpop.trf.xlu0
        %v472 = vpop.trf.xlu0
        %v473 = vpop.trf.xlu0
        %v474 = vpop.trf.xlu0
        %v475 = vpop.trf.xlu0
        %v476 = vpop.trf.xlu0
        %v477 = vpop.trf.xlu0
        %478 = vxpose.xlu0.b32.start [1/16] %v364, 128
        %479 = vxpose.xlu0.b32.cont [2/16] %v365, 128
        %480 = vxpose.xlu0.b32.cont [3/16] 0.0, 128
        %481 = vxpose.xlu0.b32.cont [4/16] 0.0, 128
        %482 = vxpose.xlu0.b32.cont [5/16] 0.0, 128
        %483 = vxpose.xlu0.b32.cont [6/16] 0.0, 128
        %484 = vxpose.xlu0.b32.cont [7/16] 0.0, 128
        %485 = vxpose.xlu0.b32.cont [8/16] 0.0, 128
        %486 = vxpose.xlu0.b32.cont [9/16] 0.0, 128
        %487 = vxpose.xlu0.b32.cont [10/16] 0.0, 128
        %488 = vxpose.xlu0.b32.cont [11/16] 0.0, 128
        %489 = vxpose.xlu0.b32.cont [12/16] 0.0, 128
        %490 = vxpose.xlu0.b32.cont [13/16] 0.0, 128
        %491 = vxpose.xlu0.b32.cont [14/16] 0.0, 128
        %492 = vxpose.xlu0.b32.cont [15/16] 0.0, 128
        %493 = vxpose.xlu0.b32.end [16/16] 0.0, 128
        %v494 = vpop.trf.xlu0
        %v495 = vpop.trf.xlu0
        %v496 = vpop.trf.xlu0
        %v497 = vpop.trf.xlu0
        %v498 = vpop.trf.xlu0
        %v499 = vpop.trf.xlu0
        %v500 = vpop.trf.xlu0
        %v501 = vpop.trf.xlu0
        %v502 = vpop.trf.xlu0
        %v503 = vpop.trf.xlu0
        %v504 = vpop.trf.xlu0
        %v505 = vpop.trf.xlu0
        %v506 = vpop.trf.xlu0
        %v507 = vpop.trf.xlu0
        %v508 = vpop.trf.xlu0
        %v509 = vpop.trf.xlu0
        %vm510 = vcmask 130048
        %v512 = vsel %vm510, %v398, 0
        %v515 = vsel %vm510, %v399, 0
        %v518 = vsel %vm510, %v400, 0
        %v521 = vsel %vm510, %v401, 0
        %v524 = vsel %vm510, %v402, 0
        %v527 = vsel %vm510, %v403, 0
        %v530 = vsel %vm510, %v404, 0
        %v533 = vsel %vm510, %v405, 0
        %v536 = vsel %vm510, %v406, 0
        %v539 = vsel %vm510, %v407, 0
        %v542 = vsel %vm510, %v408, 0
        %v545 = vsel %vm510, %v409, 0
        %v548 = vsel %vm510, %v410, 0
        %v551 = vsel %vm510, %v411, 0
        %v554 = vsel %vm510, %v412, 0
        %v557 = vsel %vm510, %v413, 0
        %559 = vmatprep.subr.mxu0 0.0
        %560 = vmatpush1.msra.mxu0 0.0
        %561 = vmatprep.subr.mxu0 0.0
        %562 = vmatpush1.msra.mxu0 0.0
        %563 = vmatprep.subr.mxu0 0.0
        %564 = vmatpush1.msra.mxu0 0.0
        %565 = vmatprep.subr.mxu0 0.0
        %566 = vmatpush1.msra.mxu0 0.0
        %567 = vmatprep.subr.mxu0 0.0
        %568 = vmatpush1.msra.mxu0 0.0
        %569 = vmatprep.subr.mxu0 0.0
        %570 = vmatpush1.msra.mxu0 0.0
        %571 = vmatprep.subr.mxu0 0.0
        %572 = vmatpush1.msra.mxu0 0.0
        %573 = vmatprep.subr.mxu0 0.0
        %574 = vmatpush1.msra.mxu0 0.0
        %575 = vmatprep.subr.mxu0 0.0
        %576 = vmatpush1.msra.mxu0 0.0
        %577 = vmatprep.subr.mxu0 0.0
        %578 = vmatpush1.msra.mxu0 0.0
        %579 = vmatprep.subr.mxu0 0.0
        %580 = vmatpush1.msra.mxu0 0.0
        %581 = vmatprep.subr.mxu0 0.0
        %582 = vmatpush1.msra.mxu0 0.0
        %583 = vmatprep.subr.mxu0 0.0
        %584 = vmatpush1.msra.mxu0 0.0
        %585 = vmatprep.subr.mxu0 0.0
        %586 = vmatpush1.msra.mxu0 0.0
        %587 = vmatprep.subr.mxu0 0.0
        %588 = vmatpush1.msra.mxu0 %v375
        %589 = vmatprep.subr.mxu0 0.0
        %590 = vmatpush1.msra.mxu0 %v374
        %591 = vmatprep.subr.mxu0 0.0
        %592 = vmatpush2.msra.mxu0 0.0
        %593 = vmatprep.subr.mxu0 0.0
        %594 = vmatpush2.msra.mxu0 0.0
        %595 = vmatprep.subr.mxu0 0.0
        %596 = vmatpush2.msra.mxu0 0.0
        %597 = vmatprep.subr.mxu0 0.0
        %598 = vmatpush2.msra.mxu0 0.0
        %599 = vmatprep.subr.mxu0 0.0
        %600 = vmatpush2.msra.mxu0 0.0
        %601 = vmatprep.subr.mxu0 0.0
        %602 = vmatpush2.msra.mxu0 0.0
        %603 = vmatprep.subr.mxu0 0.0
        %604 = vmatpush2.msra.mxu0 0.0
        %605 = vmatprep.subr.mxu0 0.0
        %606 = vmatpush2.msra.mxu0 0.0
        %607 = vmatprep.subr.mxu0 0.0
        %608 = vmatpush2.msra.mxu0 0.0
        %609 = vmatprep.subr.mxu0 0.0
        %610 = vmatpush2.msra.mxu0 0.0
        %611 = vmatprep.subr.mxu0 0.0
        %612 = vmatpush2.msra.mxu0 0.0
        %613 = vmatprep.subr.mxu0 0.0
        %614 = vmatpush2.msra.mxu0 0.0
        %615 = vmatprep.subr.mxu0 0.0
        %616 = vmatpush2.msra.mxu0 0.0
        %617 = vmatprep.subr.mxu0 0.0
        %618 = vmatpush2.msra.mxu0 0.0
        %619 = vmatprep.subr.mxu0 0.0
        %620 = vmatpush2.msra.mxu0 0.0
        %621 = vmatprep.subr.mxu0 0.0
        %622 = vmatpush2.msra.mxu0 0.0
        %623 = vmatprep.mubr.f32.mxu0 0.0
        %624 = vmatmul.mubr.f32.gmra.mxu0 %v512
        %v625 = vpop.f32.mrf.mxu0
        %v626 = vadd.f32 0.0, %v625
        %v627 = vpop.f32.mrf.mxu0
        %628 = vmatprep.mubr.f32.mxu0 0.0
        %629 = vmatmul.mubr.f32.gmra.mxu0 %v515
        %v630 = vpop.f32.mrf.mxu0
        %v631 = vadd.f32 0.0, %v630
        %v632 = vpop.f32.mrf.mxu0
        %633 = vmatprep.mubr.f32.mxu0 0.0
        %634 = vmatmul.mubr.f32.gmra.mxu0 %v518
        %v635 = vpop.f32.mrf.mxu0
        %v636 = vadd.f32 0.0, %v635
        %v637 = vpop.f32.mrf.mxu0
        %638 = vmatprep.mubr.f32.mxu0 0.0
        %639 = vmatmul.mubr.f32.gmra.mxu0 %v521
        %v640 = vpop.f32.mrf.mxu0
        %v641 = vadd.f32 0.0, %v640
        %v642 = vpop.f32.mrf.mxu0
        %643 = vmatprep.mubr.f32.mxu0 0.0
        %644 = vmatmul.mubr.f32.gmra.mxu0 %v524
        %v645 = vpop.f32.mrf.mxu0
        %v646 = vadd.f32 0.0, %v645
        %v647 = vpop.f32.mrf.mxu0
        %648 = vmatprep.mubr.f32.mxu0 0.0
        %649 = vmatmul.mubr.f32.gmra.mxu0 %v527
        %v650 = vpop.f32.mrf.mxu0
        %v651 = vadd.f32 0.0, %v650
        %v652 = vpop.f32.mrf.mxu0
        %653 = vmatprep.mubr.f32.mxu0 0.0
        %654 = vmatmul.mubr.f32.gmra.mxu0 %v530
        %v655 = vpop.f32.mrf.mxu0
        %v656 = vadd.f32 0.0, %v655
        %v657 = vpop.f32.mrf.mxu0
        %658 = vmatprep.mubr.f32.mxu0 0.0
        %659 = vmatmul.mubr.f32.gmra.mxu0 %v533
        %v660 = vpop.f32.mrf.mxu0
        %v661 = vadd.f32 0.0, %v660
        %v662 = vpop.f32.mrf.mxu0
        %663 = vmatprep.mubr.f32.mxu0 0.0
        %664 = vmatmul.mubr.f32.gmra.mxu0 %v536
        %v665 = vpop.f32.mrf.mxu0
        %v666 = vadd.f32 0.0, %v665
        %v667 = vpop.f32.mrf.mxu0
        %668 = vmatprep.mubr.f32.mxu0 0.0
        %669 = vmatmul.mubr.f32.gmra.mxu0 %v539
        %v670 = vpop.f32.mrf.mxu0
        %v671 = vadd.f32 0.0, %v670
        %v672 = vpop.f32.mrf.mxu0
        %673 = vmatprep.mubr.f32.mxu0 0.0
        %674 = vmatmul.mubr.f32.gmra.mxu0 %v542
        %v675 = vpop.f32.mrf.mxu0
        %v676 = vadd.f32 0.0, %v675
        %v677 = vpop.f32.mrf.mxu0
        %678 = vmatprep.mubr.f32.mxu0 0.0
        %679 = vmatmul.mubr.f32.gmra.mxu0 %v545
        %v680 = vpop.f32.mrf.mxu0
        %v681 = vadd.f32 0.0, %v680
        %v682 = vpop.f32.mrf.mxu0
        %683 = vmatprep.mubr.f32.mxu0 0.0
        %684 = vmatmul.mubr.f32.gmra.mxu0 %v548
        %v685 = vpop.f32.mrf.mxu0
        %v686 = vadd.f32 0.0, %v685
        %v687 = vpop.f32.mrf.mxu0
        %688 = vmatprep.mubr.f32.mxu0 0.0
        %689 = vmatmul.mubr.f32.gmra.mxu0 %v551
        %v690 = vpop.f32.mrf.mxu0
        %v691 = vadd.f32 0.0, %v690
        %v692 = vpop.f32.mrf.mxu0
        %693 = vmatprep.mubr.f32.mxu0 0.0
        %694 = vmatmul.mubr.f32.gmra.mxu0 %v554
        %v695 = vpop.f32.mrf.mxu0
        %v696 = vadd.f32 0.0, %v695
        %v697 = vpop.f32.mrf.mxu0
        %698 = vmatprep.mubr.f32.mxu0 0.0
        %699 = vmatmul.mubr.f32.gmra.mxu0 %v557
        %v700 = vpop.f32.mrf.mxu0
        %v701 = vadd.f32 0.0, %v700
        %v702 = vpop.f32.mrf.mxu0
        %703 = vdwg.mxu0
        %v705 = vsel %vm510, %v430, 0
        %v708 = vsel %vm510, %v431, 0
        %v711 = vsel %vm510, %v432, 0
        %v714 = vsel %vm510, %v433, 0
        %v717 = vsel %vm510, %v434, 0
        %v720 = vsel %vm510, %v435, 0
        %v723 = vsel %vm510, %v436, 0
        %v726 = vsel %vm510, %v437, 0
        %v729 = vsel %vm510, %v438, 0
        %v732 = vsel %vm510, %v439, 0
        %v735 = vsel %vm510, %v440, 0
        %v738 = vsel %vm510, %v441, 0
        %v741 = vsel %vm510, %v442, 0
        %v744 = vsel %vm510, %v443, 0
        %v747 = vsel %vm510, %v444, 0
        %v750 = vsel %vm510, %v445, 0
        %752 = vmatprep.subr.mxu0 0.0
        %753 = vmatpush1.msra.mxu0 0.0
        %754 = vmatprep.subr.mxu0 0.0
        %755 = vmatpush1.msra.mxu0 0.0
        %756 = vmatprep.subr.mxu0 0.0
        %757 = vmatpush1.msra.mxu0 0.0
        %758 = vmatprep.subr.mxu0 0.0
        %759 = vmatpush1.msra.mxu0 0.0
        %760 = vmatprep.subr.mxu0 0.0
        %761 = vmatpush1.msra.mxu0 0.0
        %762 = vmatprep.subr.mxu0 0.0
        %763 = vmatpush1.msra.mxu0 0.0
        %764 = vmatprep.subr.mxu0 0.0
        %765 = vmatpush1.msra.mxu0 0.0
        %766 = vmatprep.subr.mxu0 0.0
        %767 = vmatpush1.msra.mxu0 0.0
        %768 = vmatprep.subr.mxu0 0.0
        %769 = vmatpush1.msra.mxu0 0.0
        %770 = vmatprep.subr.mxu0 0.0
        %771 = vmatpush1.msra.mxu0 0.0
        %772 = vmatprep.subr.mxu0 0.0
        %773 = vmatpush1.msra.mxu0 0.0
        %774 = vmatprep.subr.mxu0 0.0
        %775 = vmatpush1.msra.mxu0 0.0
        %776 = vmatprep.subr.mxu0 0.0
        %777 = vmatpush1.msra.mxu0 0.0
        %778 = vmatprep.subr.mxu0 0.0
        %779 = vmatpush1.msra.mxu0 0.0
        %780 = vmatprep.subr.mxu0 0.0
        %781 = vmatpush1.msra.mxu0 %v377
        %782 = vmatprep.subr.mxu0 0.0
        %783 = vmatpush1.msra.mxu0 %v376
        %784 = vmatprep.subr.mxu0 0.0
        %785 = vmatpush2.msra.mxu0 0.0
        %786 = vmatprep.subr.mxu0 0.0
        %787 = vmatpush2.msra.mxu0 0.0
        %788 = vmatprep.subr.mxu0 0.0
        %789 = vmatpush2.msra.mxu0 0.0
        %790 = vmatprep.subr.mxu0 0.0
        %791 = vmatpush2.msra.mxu0 0.0
        %792 = vmatprep.subr.mxu0 0.0
        %793 = vmatpush2.msra.mxu0 0.0
        %794 = vmatprep.subr.mxu0 0.0
        %795 = vmatpush2.msra.mxu0 0.0
        %796 = vmatprep.subr.mxu0 0.0
        %797 = vmatpush2.msra.mxu0 0.0
        %798 = vmatprep.subr.mxu0 0.0
        %799 = vmatpush2.msra.mxu0 0.0
        %800 = vmatprep.subr.mxu0 0.0
        %801 = vmatpush2.msra.mxu0 0.0
        %802 = vmatprep.subr.mxu0 0.0
        %803 = vmatpush2.msra.mxu0 0.0
        %804 = vmatprep.subr.mxu0 0.0
        %805 = vmatpush2.msra.mxu0 0.0
        %806 = vmatprep.subr.mxu0 0.0
        %807 = vmatpush2.msra.mxu0 0.0
        %808 = vmatprep.subr.mxu0 0.0
        %809 = vmatpush2.msra.mxu0 0.0
        %810 = vmatprep.subr.mxu0 0.0
        %811 = vmatpush2.msra.mxu0 0.0
        %812 = vmatprep.subr.mxu0 0.0
        %813 = vmatpush2.msra.mxu0 0.0
        %814 = vmatprep.subr.mxu0 0.0
        %815 = vmatpush2.msra.mxu0 0.0
        %816 = vmatprep.mubr.f32.mxu0 0.0
        %817 = vmatmul.mubr.f32.gmra.mxu0 %v705
        %v818 = vpop.f32.mrf.mxu0
        %v819 = vadd.f32 0.0, %v818
        %v820 = vpop.f32.mrf.mxu0
        %821 = vmatprep.mubr.f32.mxu0 0.0
        %822 = vmatmul.mubr.f32.gmra.mxu0 %v708
        %v823 = vpop.f32.mrf.mxu0
        %v824 = vadd.f32 0.0, %v823
        %v825 = vpop.f32.mrf.mxu0
        %826 = vmatprep.mubr.f32.mxu0 0.0
        %827 = vmatmul.mubr.f32.gmra.mxu0 %v711
        %v828 = vpop.f32.mrf.mxu0
        %v829 = vadd.f32 0.0, %v828
        %v830 = vpop.f32.mrf.mxu0
        %831 = vmatprep.mubr.f32.mxu0 0.0
        %832 = vmatmul.mubr.f32.gmra.mxu0 %v714
        %v833 = vpop.f32.mrf.mxu0
        %v834 = vadd.f32 0.0, %v833
        %v835 = vpop.f32.mrf.mxu0
        %836 = vmatprep.mubr.f32.mxu0 0.0
        %837 = vmatmul.mubr.f32.gmra.mxu0 %v717
        %v838 = vpop.f32.mrf.mxu0
        %v839 = vadd.f32 0.0, %v838
        %v840 = vpop.f32.mrf.mxu0
        %841 = vmatprep.mubr.f32.mxu0 0.0
        %842 = vmatmul.mubr.f32.gmra.mxu0 %v720
        %v843 = vpop.f32.mrf.mxu0
        %v844 = vadd.f32 0.0, %v843
        %v845 = vpop.f32.mrf.mxu0
        %846 = vmatprep.mubr.f32.mxu0 0.0
        %847 = vmatmul.mubr.f32.gmra.mxu0 %v723
        %v848 = vpop.f32.mrf.mxu0
        %v849 = vadd.f32 0.0, %v848
        %v850 = vpop.f32.mrf.mxu0
        %851 = vmatprep.mubr.f32.mxu0 0.0
        %852 = vmatmul.mubr.f32.gmra.mxu0 %v726
        %v853 = vpop.f32.mrf.mxu0
        %v854 = vadd.f32 0.0, %v853
        %v855 = vpop.f32.mrf.mxu0
        %856 = vmatprep.mubr.f32.mxu0 0.0
        %857 = vmatmul.mubr.f32.gmra.mxu0 %v729
        %v858 = vpop.f32.mrf.mxu0
        %v859 = vadd.f32 0.0, %v858
        %v860 = vpop.f32.mrf.mxu0
        %861 = vmatprep.mubr.f32.mxu0 0.0
        %862 = vmatmul.mubr.f32.gmra.mxu0 %v732
        %v863 = vpop.f32.mrf.mxu0
        %v864 = vadd.f32 0.0, %v863
        %v865 = vpop.f32.mrf.mxu0
        %866 = vmatprep.mubr.f32.mxu0 0.0
        %867 = vmatmul.mubr.f32.gmra.mxu0 %v735
        %v868 = vpop.f32.mrf.mxu0
        %v869 = vadd.f32 0.0, %v868
        %v870 = vpop.f32.mrf.mxu0
        %871 = vmatprep.mubr.f32.mxu0 0.0
        %872 = vmatmul.mubr.f32.gmra.mxu0 %v738
        %v873 = vpop.f32.mrf.mxu0
        %v874 = vadd.f32 0.0, %v873
        %v875 = vpop.f32.mrf.mxu0
        %876 = vmatprep.mubr.f32.mxu0 0.0
        %877 = vmatmul.mubr.f32.gmra.mxu0 %v741
        %v878 = vpop.f32.mrf.mxu0
        %v879 = vadd.f32 0.0, %v878
        %v880 = vpop.f32.mrf.mxu0
        %881 = vmatprep.mubr.f32.mxu0 0.0
        %882 = vmatmul.mubr.f32.gmra.mxu0 %v744
        %v883 = vpop.f32.mrf.mxu0
        %v884 = vadd.f32 0.0, %v883
        %v885 = vpop.f32.mrf.mxu0
        %886 = vmatprep.mubr.f32.mxu0 0.0
        %887 = vmatmul.mubr.f32.gmra.mxu0 %v747
        %v888 = vpop.f32.mrf.mxu0
        %v889 = vadd.f32 0.0, %v888
        %v890 = vpop.f32.mrf.mxu0
        %891 = vmatprep.mubr.f32.mxu0 0.0
        %892 = vmatmul.mubr.f32.gmra.mxu0 %v750
        %v893 = vpop.f32.mrf.mxu0
        %v894 = vadd.f32 0.0, %v893
        %v895 = vpop.f32.mrf.mxu0
        %896 = vdwg.mxu0
        %v898 = vsel %vm510, %v462, 0
        %v901 = vsel %vm510, %v463, 0
        %v904 = vsel %vm510, %v464, 0
        %v907 = vsel %vm510, %v465, 0
        %v910 = vsel %vm510, %v466, 0
        %v913 = vsel %vm510, %v467, 0
        %v916 = vsel %vm510, %v468, 0
        %v919 = vsel %vm510, %v469, 0
        %v922 = vsel %vm510, %v470, 0
        %v925 = vsel %vm510, %v471, 0
        %v928 = vsel %vm510, %v472, 0
        %v931 = vsel %vm510, %v473, 0
        %v934 = vsel %vm510, %v474, 0
        %v937 = vsel %vm510, %v475, 0
        %v940 = vsel %vm510, %v476, 0
        %v943 = vsel %vm510, %v477, 0
        %945 = vmatprep.subr.mxu0 0.0
        %946 = vmatpush1.msra.mxu0 0.0
        %947 = vmatprep.subr.mxu0 0.0
        %948 = vmatpush1.msra.mxu0 0.0
        %949 = vmatprep.subr.mxu0 0.0
        %950 = vmatpush1.msra.mxu0 0.0
        %951 = vmatprep.subr.mxu0 0.0
        %952 = vmatpush1.msra.mxu0 0.0
        %953 = vmatprep.subr.mxu0 0.0
        %954 = vmatpush1.msra.mxu0 0.0
        %955 = vmatprep.subr.mxu0 0.0
        %956 = vmatpush1.msra.mxu0 0.0
        %957 = vmatprep.subr.mxu0 0.0
        %958 = vmatpush1.msra.mxu0 0.0
        %959 = vmatprep.subr.mxu0 0.0
        %960 = vmatpush1.msra.mxu0 0.0
        %961 = vmatprep.subr.mxu0 0.0
        %962 = vmatpush1.msra.mxu0 0.0
        %963 = vmatprep.subr.mxu0 0.0
        %964 = vmatpush1.msra.mxu0 0.0
        %965 = vmatprep.subr.mxu0 0.0
        %966 = vmatpush1.msra.mxu0 0.0
        %967 = vmatprep.subr.mxu0 0.0
        %968 = vmatpush1.msra.mxu0 0.0
        %969 = vmatprep.subr.mxu0 0.0
        %970 = vmatpush1.msra.mxu0 0.0
        %971 = vmatprep.subr.mxu0 0.0
        %972 = vmatpush1.msra.mxu0 0.0
        %973 = vmatprep.subr.mxu0 0.0
        %974 = vmatpush1.msra.mxu0 %v379
        %975 = vmatprep.subr.mxu0 0.0
        %976 = vmatpush1.msra.mxu0 %v378
        %977 = vmatprep.subr.mxu0 0.0
        %978 = vmatpush2.msra.mxu0 0.0
        %979 = vmatprep.subr.mxu0 0.0
        %980 = vmatpush2.msra.mxu0 0.0
        %981 = vmatprep.subr.mxu0 0.0
        %982 = vmatpush2.msra.mxu0 0.0
        %983 = vmatprep.subr.mxu0 0.0
        %984 = vmatpush2.msra.mxu0 0.0
        %985 = vmatprep.subr.mxu0 0.0
        %986 = vmatpush2.msra.mxu0 0.0
        %987 = vmatprep.subr.mxu0 0.0
        %988 = vmatpush2.msra.mxu0 0.0
        %989 = vmatprep.subr.mxu0 0.0
        %990 = vmatpush2.msra.mxu0 0.0
        %991 = vmatprep.subr.mxu0 0.0
        %992 = vmatpush2.msra.mxu0 0.0
        %993 = vmatprep.subr.mxu0 0.0
        %994 = vmatpush2.msra.mxu0 0.0
        %995 = vmatprep.subr.mxu0 0.0
        %996 = vmatpush2.msra.mxu0 0.0
        %997 = vmatprep.subr.mxu0 0.0
        %998 = vmatpush2.msra.mxu0 0.0
        %999 = vmatprep.subr.mxu0 0.0
        %1000 = vmatpush2.msra.mxu0 0.0
        %1001 = vmatprep.subr.mxu0 0.0
        %1002 = vmatpush2.msra.mxu0 0.0
        %1003 = vmatprep.subr.mxu0 0.0
        %1004 = vmatpush2.msra.mxu0 0.0
        %1005 = vmatprep.subr.mxu0 0.0
        %1006 = vmatpush2.msra.mxu0 0.0
        %1007 = vmatprep.subr.mxu0 0.0
        %1008 = vmatpush2.msra.mxu0 0.0
        %1009 = vmatprep.mubr.f32.mxu0 0.0
        %1010 = vmatmul.mubr.f32.gmra.mxu0 %v898
        %v1011 = vpop.f32.mrf.mxu0
        %v1012 = vadd.f32 0.0, %v1011
        %v1013 = vpop.f32.mrf.mxu0
        %1014 = vmatprep.mubr.f32.mxu0 0.0
        %1015 = vmatmul.mubr.f32.gmra.mxu0 %v901
        %v1016 = vpop.f32.mrf.mxu0
        %v1017 = vadd.f32 0.0, %v1016
        %v1018 = vpop.f32.mrf.mxu0
        %1019 = vmatprep.mubr.f32.mxu0 0.0
        %1020 = vmatmul.mubr.f32.gmra.mxu0 %v904
        %v1021 = vpop.f32.mrf.mxu0
        %v1022 = vadd.f32 0.0, %v1021
        %v1023 = vpop.f32.mrf.mxu0
        %1024 = vmatprep.mubr.f32.mxu0 0.0
        %1025 = vmatmul.mubr.f32.gmra.mxu0 %v907
        %v1026 = vpop.f32.mrf.mxu0
        %v1027 = vadd.f32 0.0, %v1026
        %v1028 = vpop.f32.mrf.mxu0
        %1029 = vmatprep.mubr.f32.mxu0 0.0
        %1030 = vmatmul.mubr.f32.gmra.mxu0 %v910
        %v1031 = vpop.f32.mrf.mxu0
        %v1032 = vadd.f32 0.0, %v1031
        %v1033 = vpop.f32.mrf.mxu0
        %1034 = vmatprep.mubr.f32.mxu0 0.0
        %1035 = vmatmul.mubr.f32.gmra.mxu0 %v913
        %v1036 = vpop.f32.mrf.mxu0
        %v1037 = vadd.f32 0.0, %v1036
        %v1038 = vpop.f32.mrf.mxu0
        %1039 = vmatprep.mubr.f32.mxu0 0.0
        %1040 = vmatmul.mubr.f32.gmra.mxu0 %v916
        %v1041 = vpop.f32.mrf.mxu0
        %v1042 = vadd.f32 0.0, %v1041
        %v1043 = vpop.f32.mrf.mxu0
        %1044 = vmatprep.mubr.f32.mxu0 0.0
        %1045 = vmatmul.mubr.f32.gmra.mxu0 %v919
        %v1046 = vpop.f32.mrf.mxu0
        %v1047 = vadd.f32 0.0, %v1046
        %v1048 = vpop.f32.mrf.mxu0
        %1049 = vmatprep.mubr.f32.mxu0 0.0
        %1050 = vmatmul.mubr.f32.gmra.mxu0 %v922
        %v1051 = vpop.f32.mrf.mxu0
        %v1052 = vadd.f32 0.0, %v1051
        %v1053 = vpop.f32.mrf.mxu0
        %1054 = vmatprep.mubr.f32.mxu0 0.0
        %1055 = vmatmul.mubr.f32.gmra.mxu0 %v925
        %v1056 = vpop.f32.mrf.mxu0
        %v1057 = vadd.f32 0.0, %v1056
        %v1058 = vpop.f32.mrf.mxu0
        %1059 = vmatprep.mubr.f32.mxu0 0.0
        %1060 = vmatmul.mubr.f32.gmra.mxu0 %v928
        %v1061 = vpop.f32.mrf.mxu0
        %v1062 = vadd.f32 0.0, %v1061
        %v1063 = vpop.f32.mrf.mxu0
        %1064 = vmatprep.mubr.f32.mxu0 0.0
        %1065 = vmatmul.mubr.f32.gmra.mxu0 %v931
        %v1066 = vpop.f32.mrf.mxu0
        %v1067 = vadd.f32 0.0, %v1066
        %v1068 = vpop.f32.mrf.mxu0
        %1069 = vmatprep.mubr.f32.mxu0 0.0
        %1070 = vmatmul.mubr.f32.gmra.mxu0 %v934
        %v1071 = vpop.f32.mrf.mxu0
        %v1072 = vadd.f32 0.0, %v1071
        %v1073 = vpop.f32.mrf.mxu0
        %1074 = vmatprep.mubr.f32.mxu0 0.0
        %1075 = vmatmul.mubr.f32.gmra.mxu0 %v937
        %v1076 = vpop.f32.mrf.mxu0
        %v1077 = vadd.f32 0.0, %v1076
        %v1078 = vpop.f32.mrf.mxu0
        %1079 = vmatprep.mubr.f32.mxu0 0.0
        %1080 = vmatmul.mubr.f32.gmra.mxu0 %v940
        %v1081 = vpop.f32.mrf.mxu0
        %v1082 = vadd.f32 0.0, %v1081
        %v1083 = vpop.f32.mrf.mxu0
        %1084 = vmatprep.mubr.f32.mxu0 0.0
        %1085 = vmatmul.mubr.f32.gmra.mxu0 %v943
        %v1086 = vpop.f32.mrf.mxu0
        %v1087 = vadd.f32 0.0, %v1086
        %v1088 = vpop.f32.mrf.mxu0
        %1089 = vdwg.mxu0
        %v1091 = vsel %vm510, %v494, 0
        %v1094 = vsel %vm510, %v495, 0
        %v1097 = vsel %vm510, %v496, 0
        %v1100 = vsel %vm510, %v497, 0
        %v1103 = vsel %vm510, %v498, 0
        %v1106 = vsel %vm510, %v499, 0
        %v1109 = vsel %vm510, %v500, 0
        %v1112 = vsel %vm510, %v501, 0
        %v1115 = vsel %vm510, %v502, 0
        %v1118 = vsel %vm510, %v503, 0
        %v1121 = vsel %vm510, %v504, 0
        %v1124 = vsel %vm510, %v505, 0
        %v1127 = vsel %vm510, %v506, 0
        %v1130 = vsel %vm510, %v507, 0
        %v1133 = vsel %vm510, %v508, 0
        %v1136 = vsel %vm510, %v509, 0
        %1138 = vmatprep.subr.mxu0 0.0
        %1139 = vmatpush1.msra.mxu0 0.0
        %1140 = vmatprep.subr.mxu0 0.0
        %1141 = vmatpush1.msra.mxu0 0.0
        %1142 = vmatprep.subr.mxu0 0.0
        %1143 = vmatpush1.msra.mxu0 0.0
        %1144 = vmatprep.subr.mxu0 0.0
        %1145 = vmatpush1.msra.mxu0 0.0
        %1146 = vmatprep.subr.mxu0 0.0
        %1147 = vmatpush1.msra.mxu0 0.0
        %1148 = vmatprep.subr.mxu0 0.0
        %1149 = vmatpush1.msra.mxu0 0.0
        %1150 = vmatprep.subr.mxu0 0.0
        %1151 = vmatpush1.msra.mxu0 0.0
        %1152 = vmatprep.subr.mxu0 0.0
        %1153 = vmatpush1.msra.mxu0 0.0
        %1154 = vmatprep.subr.mxu0 0.0
        %1155 = vmatpush1.msra.mxu0 0.0
        %1156 = vmatprep.subr.mxu0 0.0
        %1157 = vmatpush1.msra.mxu0 0.0
        %1158 = vmatprep.subr.mxu0 0.0
        %1159 = vmatpush1.msra.mxu0 0.0
        %1160 = vmatprep.subr.mxu0 0.0
        %1161 = vmatpush1.msra.mxu0 0.0
        %1162 = vmatprep.subr.mxu0 0.0
        %1163 = vmatpush1.msra.mxu0 0.0
        %1164 = vmatprep.subr.mxu0 0.0
        %1165 = vmatpush1.msra.mxu0 0.0
        %1166 = vmatprep.subr.mxu0 0.0
        %1167 = vmatpush1.msra.mxu0 %v381
        %1168 = vmatprep.subr.mxu0 0.0
        %1169 = vmatpush1.msra.mxu0 %v380
        %1170 = vmatprep.subr.mxu0 0.0
        %1171 = vmatpush2.msra.mxu0 0.0
        %1172 = vmatprep.subr.mxu0 0.0
        %1173 = vmatpush2.msra.mxu0 0.0
        %1174 = vmatprep.subr.mxu0 0.0
        %1175 = vmatpush2.msra.mxu0 0.0
        %1176 = vmatprep.subr.mxu0 0.0
        %1177 = vmatpush2.msra.mxu0 0.0
        %1178 = vmatprep.subr.mxu0 0.0
        %1179 = vmatpush2.msra.mxu0 0.0
        %1180 = vmatprep.subr.mxu0 0.0
        %1181 = vmatpush2.msra.mxu0 0.0
        %1182 = vmatprep.subr.mxu0 0.0
        %1183 = vmatpush2.msra.mxu0 0.0
        %1184 = vmatprep.subr.mxu0 0.0
        %1185 = vmatpush2.msra.mxu0 0.0
        %1186 = vmatprep.subr.mxu0 0.0
        %1187 = vmatpush2.msra.mxu0 0.0
        %1188 = vmatprep.subr.mxu0 0.0
        %1189 = vmatpush2.msra.mxu0 0.0
        %1190 = vmatprep.subr.mxu0 0.0
        %1191 = vmatpush2.msra.mxu0 0.0
        %1192 = vmatprep.subr.mxu0 0.0
        %1193 = vmatpush2.msra.mxu0 0.0
        %1194 = vmatprep.subr.mxu0 0.0
        %1195 = vmatpush2.msra.mxu0 0.0
        %1196 = vmatprep.subr.mxu0 0.0
        %1197 = vmatpush2.msra.mxu0 0.0
        %1198 = vmatprep.subr.mxu0 0.0
        %1199 = vmatpush2.msra.mxu0 0.0
        %1200 = vmatprep.subr.mxu0 0.0
        %1201 = vmatpush2.msra.mxu0 0.0
        %1202 = vmatprep.mubr.f32.mxu0 0.0
        %1203 = vmatmul.mubr.f32.gmra.mxu0 %v1091
        %v1204 = vpop.f32.mrf.mxu0
        %v1205 = vadd.f32 0.0, %v1204
        %v1206 = vpop.f32.mrf.mxu0
        %1207 = vmatprep.mubr.f32.mxu0 0.0
        %1208 = vmatmul.mubr.f32.gmra.mxu0 %v1094
        %v1209 = vpop.f32.mrf.mxu0
        %v1210 = vadd.f32 0.0, %v1209
        %v1211 = vpop.f32.mrf.mxu0
        %1212 = vmatprep.mubr.f32.mxu0 0.0
        %1213 = vmatmul.mubr.f32.gmra.mxu0 %v1097
        %v1214 = vpop.f32.mrf.mxu0
        %v1215 = vadd.f32 0.0, %v1214
        %v1216 = vpop.f32.mrf.mxu0
        %1217 = vmatprep.mubr.f32.mxu0 0.0
        %1218 = vmatmul.mubr.f32.gmra.mxu0 %v1100
        %v1219 = vpop.f32.mrf.mxu0
        %v1220 = vadd.f32 0.0, %v1219
        %v1221 = vpop.f32.mrf.mxu0
        %1222 = vmatprep.mubr.f32.mxu0 0.0
        %1223 = vmatmul.mubr.f32.gmra.mxu0 %v1103
        %v1224 = vpop.f32.mrf.mxu0
        %v1225 = vadd.f32 0.0, %v1224
        %v1226 = vpop.f32.mrf.mxu0
        %1227 = vmatprep.mubr.f32.mxu0 0.0
        %1228 = vmatmul.mubr.f32.gmra.mxu0 %v1106
        %v1229 = vpop.f32.mrf.mxu0
        %v1230 = vadd.f32 0.0, %v1229
        %v1231 = vpop.f32.mrf.mxu0
        %1232 = vmatprep.mubr.f32.mxu0 0.0
        %1233 = vmatmul.mubr.f32.gmra.mxu0 %v1109
        %v1234 = vpop.f32.mrf.mxu0
        %v1235 = vadd.f32 0.0, %v1234
        %v1236 = vpop.f32.mrf.mxu0
        %1237 = vmatprep.mubr.f32.mxu0 0.0
        %1238 = vmatmul.mubr.f32.gmra.mxu0 %v1112
        %v1239 = vpop.f32.mrf.mxu0
        %v1240 = vadd.f32 0.0, %v1239
        %v1241 = vpop.f32.mrf.mxu0
        %1242 = vmatprep.mubr.f32.mxu0 0.0
        %1243 = vmatmul.mubr.f32.gmra.mxu0 %v1115
        %v1244 = vpop.f32.mrf.mxu0
        %v1245 = vadd.f32 0.0, %v1244
        %v1246 = vpop.f32.mrf.mxu0
        %1247 = vmatprep.mubr.f32.mxu0 0.0
        %1248 = vmatmul.mubr.f32.gmra.mxu0 %v1118
        %v1249 = vpop.f32.mrf.mxu0
        %v1250 = vadd.f32 0.0, %v1249
        %v1251 = vpop.f32.mrf.mxu0
        %1252 = vmatprep.mubr.f32.mxu0 0.0
        %1253 = vmatmul.mubr.f32.gmra.mxu0 %v1121
        %v1254 = vpop.f32.mrf.mxu0
        %v1255 = vadd.f32 0.0, %v1254
        %v1256 = vpop.f32.mrf.mxu0
        %1257 = vmatprep.mubr.f32.mxu0 0.0
        %1258 = vmatmul.mubr.f32.gmra.mxu0 %v1124
        %v1259 = vpop.f32.mrf.mxu0
        %v1260 = vadd.f32 0.0, %v1259
        %v1261 = vpop.f32.mrf.mxu0
        %1262 = vmatprep.mubr.f32.mxu0 0.0
        %1263 = vmatmul.mubr.f32.gmra.mxu0 %v1127
        %v1264 = vpop.f32.mrf.mxu0
        %v1265 = vadd.f32 0.0, %v1264
        %v1266 = vpop.f32.mrf.mxu0
        %1267 = vmatprep.mubr.f32.mxu0 0.0
        %1268 = vmatmul.mubr.f32.gmra.mxu0 %v1130
        %v1269 = vpop.f32.mrf.mxu0
        %v1270 = vadd.f32 0.0, %v1269
        %v1271 = vpop.f32.mrf.mxu0
        %1272 = vmatprep.mubr.f32.mxu0 0.0
        %1273 = vmatmul.mubr.f32.gmra.mxu0 %v1133
        %v1274 = vpop.f32.mrf.mxu0
        %v1275 = vadd.f32 0.0, %v1274
        %v1276 = vpop.f32.mrf.mxu0
        %1277 = vmatprep.mubr.f32.mxu0 0.0
        %1278 = vmatmul.mubr.f32.gmra.mxu0 %v1136
        %v1279 = vpop.f32.mrf.mxu0
        %v1280 = vadd.f32 0.0, %v1279
        %v1281 = vpop.f32.mrf.mxu0
        %1282 = vdwg.mxu0
        %v1283 = vmax.f32 %v626, %v631
        %v1284 = vmax.f32 %v1283, %v636
        %v1285 = vmax.f32 %v1284, %v641
        %v1286 = vmax.f32 %v1285, %v646
        %v1287 = vmax.f32 %v1286, %v651
        %v1288 = vmax.f32 %v1287, %v656
        %v1289 = vmax.f32 %v1288, %v661
        %v1290 = vmax.f32 %v1289, %v666
        %v1291 = vmax.f32 %v1290, %v671
        %v1292 = vmax.f32 %v1291, %v676
        %v1293 = vmax.f32 %v1292, %v681
        %v1294 = vmax.f32 %v1293, %v686
        %v1295 = vmax.f32 %v1294, %v691
        %v1296 = vmax.f32 %v1295, %v696
        %v1297 = vmax.f32 %v1296, %v701
        %v1298 = vrot.slane %v1297, 4
        %v1299 = vmax.f32 %v1297, %v1298
        %v1300 = vrot.slane %v1299, 2
        %v1301 = vmax.f32 %v1299, %v1300
        %v1302 = vrot.slane %v1301, 1
        %v1303 = vmax.f32 %v1301, %v1302
        %v1304 = vmax.f32 %v819, %v824
        %v1305 = vmax.f32 %v1304, %v829
        %v1306 = vmax.f32 %v1305, %v834
        %v1307 = vmax.f32 %v1306, %v839
        %v1308 = vmax.f32 %v1307, %v844
        %v1309 = vmax.f32 %v1308, %v849
        %v1310 = vmax.f32 %v1309, %v854
        %v1311 = vmax.f32 %v1310, %v859
        %v1312 = vmax.f32 %v1311, %v864
        %v1313 = vmax.f32 %v1312, %v869
        %v1314 = vmax.f32 %v1313, %v874
        %v1315 = vmax.f32 %v1314, %v879
        %v1316 = vmax.f32 %v1315, %v884
        %v1317 = vmax.f32 %v1316, %v889
        %v1318 = vmax.f32 %v1317, %v894
        %v1319 = vrot.slane %v1318, 4
        %v1320 = vmax.f32 %v1318, %v1319
        %v1321 = vrot.slane %v1320, 2
        %v1322 = vmax.f32 %v1320, %v1321
        %v1323 = vrot.slane %v1322, 1
        %v1324 = vmax.f32 %v1322, %v1323
        %v1325 = vmax.f32 %v1012, %v1017
        %v1326 = vmax.f32 %v1325, %v1022
        %v1327 = vmax.f32 %v1326, %v1027
        %v1328 = vmax.f32 %v1327, %v1032
        %v1329 = vmax.f32 %v1328, %v1037
        %v1330 = vmax.f32 %v1329, %v1042
        %v1331 = vmax.f32 %v1330, %v1047
        %v1332 = vmax.f32 %v1331, %v1052
        %v1333 = vmax.f32 %v1332, %v1057
        %v1334 = vmax.f32 %v1333, %v1062
        %v1335 = vmax.f32 %v1334, %v1067
        %v1336 = vmax.f32 %v1335, %v1072
        %v1337 = vmax.f32 %v1336, %v1077
        %v1338 = vmax.f32 %v1337, %v1082
        %v1339 = vmax.f32 %v1338, %v1087
        %v1340 = vrot.slane %v1339, 4
        %v1341 = vmax.f32 %v1339, %v1340
        %v1342 = vrot.slane %v1341, 2
        %v1343 = vmax.f32 %v1341, %v1342
        %v1344 = vrot.slane %v1343, 1
        %v1345 = vmax.f32 %v1343, %v1344
        %v1346 = vmax.f32 %v1205, %v1210
        %v1347 = vmax.f32 %v1346, %v1215
        %v1348 = vmax.f32 %v1347, %v1220
        %v1349 = vmax.f32 %v1348, %v1225
        %v1350 = vmax.f32 %v1349, %v1230
        %v1351 = vmax.f32 %v1350, %v1235
        %v1352 = vmax.f32 %v1351, %v1240
        %v1353 = vmax.f32 %v1352, %v1245
        %v1354 = vmax.f32 %v1353, %v1250
        %v1355 = vmax.f32 %v1354, %v1255
        %v1356 = vmax.f32 %v1355, %v1260
        %v1357 = vmax.f32 %v1356, %v1265
        %v1358 = vmax.f32 %v1357, %v1270
        %v1359 = vmax.f32 %v1358, %v1275
        %v1360 = vmax.f32 %v1359, %v1280
        %v1361 = vrot.slane %v1360, 4
        %v1362 = vmax.f32 %v1360, %v1361
        %v1363 = vrot.slane %v1362, 2
        %v1364 = vmax.f32 %v1362, %v1363
        %v1365 = vrot.slane %v1364, 1
        %v1366 = vmax.f32 %v1364, %v1365
        %v1367 = vsub.f32 %v626, %v1303
        %v1368 = vsub.f32 %v631, %v1303
        %v1369 = vsub.f32 %v636, %v1303
        %v1370 = vsub.f32 %v641, %v1303
        %v1371 = vsub.f32 %v646, %v1303
        %v1372 = vsub.f32 %v651, %v1303
        %v1373 = vsub.f32 %v656, %v1303
        %v1374 = vsub.f32 %v661, %v1303
        %v1375 = vsub.f32 %v666, %v1303
        %v1376 = vsub.f32 %v671, %v1303
        %v1377 = vsub.f32 %v676, %v1303
        %v1378 = vsub.f32 %v681, %v1303
        %v1379 = vsub.f32 %v686, %v1303
        %v1380 = vsub.f32 %v691, %v1303
        %v1381 = vsub.f32 %v696, %v1303
        %v1382 = vsub.f32 %v701, %v1303
        %v1383 = vsub.f32 %v819, %v1324
        %v1384 = vsub.f32 %v824, %v1324
        %v1385 = vsub.f32 %v829, %v1324
        %v1386 = vsub.f32 %v834, %v1324
        %v1387 = vsub.f32 %v839, %v1324
        %v1388 = vsub.f32 %v844, %v1324
        %v1389 = vsub.f32 %v849, %v1324
        %v1390 = vsub.f32 %v854, %v1324
        %v1391 = vsub.f32 %v859, %v1324
        %v1392 = vsub.f32 %v864, %v1324
        %v1393 = vsub.f32 %v869, %v1324
        %v1394 = vsub.f32 %v874, %v1324
        %v1395 = vsub.f32 %v879, %v1324
        %v1396 = vsub.f32 %v884, %v1324
        %v1397 = vsub.f32 %v889, %v1324
        %v1398 = vsub.f32 %v894, %v1324
        %v1399 = vsub.f32 %v1012, %v1345
        %v1400 = vsub.f32 %v1017, %v1345
        %v1401 = vsub.f32 %v1022, %v1345
        %v1402 = vsub.f32 %v1027, %v1345
        %v1403 = vsub.f32 %v1032, %v1345
        %v1404 = vsub.f32 %v1037, %v1345
        %v1405 = vsub.f32 %v1042, %v1345
        %v1406 = vsub.f32 %v1047, %v1345
        %v1407 = vsub.f32 %v1052, %v1345
        %v1408 = vsub.f32 %v1057, %v1345
        %v1409 = vsub.f32 %v1062, %v1345
        %v1410 = vsub.f32 %v1067, %v1345
        %v1411 = vsub.f32 %v1072, %v1345
        %v1412 = vsub.f32 %v1077, %v1345
        %v1413 = vsub.f32 %v1082, %v1345
        %v1414 = vsub.f32 %v1087, %v1345
        %v1415 = vsub.f32 %v1205, %v1366
        %v1416 = vsub.f32 %v1210, %v1366
        %v1417 = vsub.f32 %v1215, %v1366
        %v1418 = vsub.f32 %v1220, %v1366
        %v1419 = vsub.f32 %v1225, %v1366
        %v1420 = vsub.f32 %v1230, %v1366
        %v1421 = vsub.f32 %v1235, %v1366
        %v1422 = vsub.f32 %v1240, %v1366
        %v1423 = vsub.f32 %v1245, %v1366
        %v1424 = vsub.f32 %v1250, %v1366
        %v1425 = vsub.f32 %v1255, %v1366
        %v1426 = vsub.f32 %v1260, %v1366
        %v1427 = vsub.f32 %v1265, %v1366
        %v1428 = vsub.f32 %v1270, %v1366
        %v1429 = vsub.f32 %v1275, %v1366
        %v1430 = vsub.f32 %v1280, %v1366
        %v1431 = vmul.f32 %v1367, 1.442695
        %v1432 = vpow.pop %v1431
        %v1433 = vmul.f32 %v1368, 1.442695
        %v1434 = vpow.pop %v1433
        %v1435 = vmul.f32 %v1369, 1.442695
        %v1436 = vpow.pop %v1435
        %v1437 = vmul.f32 %v1370, 1.442695
        %v1438 = vpow.pop %v1437
        %v1439 = vmul.f32 %v1371, 1.442695
        %v1440 = vpow.pop %v1439
        %v1441 = vmul.f32 %v1372, 1.442695
        %v1442 = vpow.pop %v1441
        %v1443 = vmul.f32 %v1373, 1.442695
        %v1444 = vpow.pop %v1443
        %v1445 = vmul.f32 %v1374, 1.442695
        %v1446 = vpow.pop %v1445
        %v1447 = vmul.f32 %v1375, 1.442695
        %v1448 = vpow.pop %v1447
        %v1449 = vmul.f32 %v1376, 1.442695
        %v1450 = vpow.pop %v1449
        %v1451 = vmul.f32 %v1377, 1.442695
        %v1452 = vpow.pop %v1451
        %v1453 = vmul.f32 %v1378, 1.442695
        %v1454 = vpow.pop %v1453
        %v1455 = vmul.f32 %v1379, 1.442695
        %v1456 = vpow.pop %v1455
        %v1457 = vmul.f32 %v1380, 1.442695
        %v1458 = vpow.pop %v1457
        %v1459 = vmul.f32 %v1381, 1.442695
        %v1460 = vpow.pop %v1459
        %v1461 = vmul.f32 %v1382, 1.442695
        %v1462 = vpow.pop %v1461
        %v1463 = vmul.f32 %v1383, 1.442695
        %v1464 = vpow.pop %v1463
        %v1465 = vmul.f32 %v1384, 1.442695
        %v1466 = vpow.pop %v1465
        %v1467 = vmul.f32 %v1385, 1.442695
        %v1468 = vpow.pop %v1467
        %v1469 = vmul.f32 %v1386, 1.442695
        %v1470 = vpow.pop %v1469
        %v1471 = vmul.f32 %v1387, 1.442695
        %v1472 = vpow.pop %v1471
        %v1473 = vmul.f32 %v1388, 1.442695
        %v1474 = vpow.pop %v1473
        %v1475 = vmul.f32 %v1389, 1.442695
        %v1476 = vpow.pop %v1475
        %v1477 = vmul.f32 %v1390, 1.442695
        %v1478 = vpow.pop %v1477
        %v1479 = vmul.f32 %v1391, 1.442695
        %v1480 = vpow.pop %v1479
        %v1481 = vmul.f32 %v1392, 1.442695
        %v1482 = vpow.pop %v1481
        %v1483 = vmul.f32 %v1393, 1.442695
        %v1484 = vpow.pop %v1483
        %v1485 = vmul.f32 %v1394, 1.442695
        %v1486 = vpow.pop %v1485
        %v1487 = vmul.f32 %v1395, 1.442695
        %v1488 = vpow.pop %v1487
        %v1489 = vmul.f32 %v1396, 1.442695
        %v1490 = vpow.pop %v1489
        %v1491 = vmul.f32 %v1397, 1.442695
        %v1492 = vpow.pop %v1491
        %v1493 = vmul.f32 %v1398, 1.442695
        %v1494 = vpow.pop %v1493
        %v1495 = vmul.f32 %v1399, 1.442695
        %v1496 = vpow.pop %v1495
        %v1497 = vmul.f32 %v1400, 1.442695
        %v1498 = vpow.pop %v1497
        %v1499 = vmul.f32 %v1401, 1.442695
        %v1500 = vpow.pop %v1499
        %v1501 = vmul.f32 %v1402, 1.442695
        %v1502 = vpow.pop %v1501
        %v1503 = vmul.f32 %v1403, 1.442695
        %v1504 = vpow.pop %v1503
        %v1505 = vmul.f32 %v1404, 1.442695
        %v1506 = vpow.pop %v1505
        %v1507 = vmul.f32 %v1405, 1.442695
        %v1508 = vpow.pop %v1507
        %v1509 = vmul.f32 %v1406, 1.442695
        %v1510 = vpow.pop %v1509
        %v1511 = vmul.f32 %v1407, 1.442695
        %v1512 = vpow.pop %v1511
        %v1513 = vmul.f32 %v1408, 1.442695
        %v1514 = vpow.pop %v1513
        %v1515 = vmul.f32 %v1409, 1.442695
        %v1516 = vpow.pop %v1515
        %v1517 = vmul.f32 %v1410, 1.442695
        %v1518 = vpow.pop %v1517
        %v1519 = vmul.f32 %v1411, 1.442695
        %v1520 = vpow.pop %v1519
        %v1521 = vmul.f32 %v1412, 1.442695
        %v1522 = vpow.pop %v1521
        %v1523 = vmul.f32 %v1413, 1.442695
        %v1524 = vpow.pop %v1523
        %v1525 = vmul.f32 %v1414, 1.442695
        %v1526 = vpow.pop %v1525
        %v1527 = vmul.f32 %v1415, 1.442695
        %v1528 = vpow.pop %v1527
        %v1529 = vmul.f32 %v1416, 1.442695
        %v1530 = vpow.pop %v1529
        %v1531 = vmul.f32 %v1417, 1.442695
        %v1532 = vpow.pop %v1531
        %v1533 = vmul.f32 %v1418, 1.442695
        %v1534 = vpow.pop %v1533
        %v1535 = vmul.f32 %v1419, 1.442695
        %v1536 = vpow.pop %v1535
        %v1537 = vmul.f32 %v1420, 1.442695
        %v1538 = vpow.pop %v1537
        %v1539 = vmul.f32 %v1421, 1.442695
        %v1540 = vpow.pop %v1539
        %v1541 = vmul.f32 %v1422, 1.442695
        %v1542 = vpow.pop %v1541
        %v1543 = vmul.f32 %v1423, 1.442695
        %v1544 = vpow.pop %v1543
        %v1545 = vmul.f32 %v1424, 1.442695
        %v1546 = vpow.pop %v1545
        %v1547 = vmul.f32 %v1425, 1.442695
        %v1548 = vpow.pop %v1547
        %v1549 = vmul.f32 %v1426, 1.442695
        %v1550 = vpow.pop %v1549
        %v1551 = vmul.f32 %v1427, 1.442695
        %v1552 = vpow.pop %v1551
        %v1553 = vmul.f32 %v1428, 1.442695
        %v1554 = vpow.pop %v1553
        %v1555 = vmul.f32 %v1429, 1.442695
        %v1556 = vpow.pop %v1555
        %v1557 = vmul.f32 %v1430, 1.442695
        %v1558 = vpow.pop %v1557
        %v1559 = vadd.f32 %v1432, %v1434
        %v1560 = vadd.f32 %v1559, %v1436
        %v1561 = vadd.f32 %v1560, %v1438
        %v1562 = vadd.f32 %v1561, %v1440
        %v1563 = vadd.f32 %v1562, %v1442
        %v1564 = vadd.f32 %v1563, %v1444
        %v1565 = vadd.f32 %v1564, %v1446
        %v1566 = vadd.f32 %v1565, %v1448
        %v1567 = vadd.f32 %v1566, %v1450
        %v1568 = vadd.f32 %v1567, %v1452
        %v1569 = vadd.f32 %v1568, %v1454
        %v1570 = vadd.f32 %v1569, %v1456
        %v1571 = vadd.f32 %v1570, %v1458
        %v1572 = vadd.f32 %v1571, %v1460
        %v1573 = vadd.f32 %v1572, %v1462
        %v1574 = vrot.slane %v1573, 4
        %v1575 = vadd.f32 %v1573, %v1574
        %v1576 = vrot.slane %v1575, 2
        %v1577 = vadd.f32 %v1575, %v1576
        %v1578 = vrot.slane %v1577, 1
        %v1579 = vadd.f32 %v1577, %v1578
        %v1580 = vadd.f32 %v1464, %v1466
        %v1581 = vadd.f32 %v1580, %v1468
        %v1582 = vadd.f32 %v1581, %v1470
        %v1583 = vadd.f32 %v1582, %v1472
        %v1584 = vadd.f32 %v1583, %v1474
        %v1585 = vadd.f32 %v1584, %v1476
        %v1586 = vadd.f32 %v1585, %v1478
        %v1587 = vadd.f32 %v1586, %v1480
        %v1588 = vadd.f32 %v1587, %v1482
        %v1589 = vadd.f32 %v1588, %v1484
        %v1590 = vadd.f32 %v1589, %v1486
        %v1591 = vadd.f32 %v1590, %v1488
        %v1592 = vadd.f32 %v1591, %v1490
        %v1593 = vadd.f32 %v1592, %v1492
        %v1594 = vadd.f32 %v1593, %v1494
        %v1595 = vrot.slane %v1594, 4
        %v1596 = vadd.f32 %v1594, %v1595
        %v1597 = vrot.slane %v1596, 2
        %v1598 = vadd.f32 %v1596, %v1597
        %v1599 = vrot.slane %v1598, 1
        %v1600 = vadd.f32 %v1598, %v1599
        %v1601 = vadd.f32 %v1496, %v1498
        %v1602 = vadd.f32 %v1601, %v1500
        %v1603 = vadd.f32 %v1602, %v1502
        %v1604 = vadd.f32 %v1603, %v1504
        %v1605 = vadd.f32 %v1604, %v1506
        %v1606 = vadd.f32 %v1605, %v1508
        %v1607 = vadd.f32 %v1606, %v1510
        %v1608 = vadd.f32 %v1607, %v1512
        %v1609 = vadd.f32 %v1608, %v1514
        %v1610 = vadd.f32 %v1609, %v1516
        %v1611 = vadd.f32 %v1610, %v1518
        %v1612 = vadd.f32 %v1611, %v1520
        %v1613 = vadd.f32 %v1612, %v1522
        %v1614 = vadd.f32 %v1613, %v1524
        %v1615 = vadd.f32 %v1614, %v1526
        %v1616 = vrot.slane %v1615, 4
        %v1617 = vadd.f32 %v1615, %v1616
        %v1618 = vrot.slane %v1617, 2
        %v1619 = vadd.f32 %v1617, %v1618
        %v1620 = vrot.slane %v1619, 1
        %v1621 = vadd.f32 %v1619, %v1620
        %v1622 = vadd.f32 %v1528, %v1530
        %v1623 = vadd.f32 %v1622, %v1532
        %v1624 = vadd.f32 %v1623, %v1534
        %v1625 = vadd.f32 %v1624, %v1536
        %v1626 = vadd.f32 %v1625, %v1538
        %v1627 = vadd.f32 %v1626, %v1540
        %v1628 = vadd.f32 %v1627, %v1542
        %v1629 = vadd.f32 %v1628, %v1544
        %v1630 = vadd.f32 %v1629, %v1546
        %v1631 = vadd.f32 %v1630, %v1548
        %v1632 = vadd.f32 %v1631, %v1550
        %v1633 = vadd.f32 %v1632, %v1552
        %v1634 = vadd.f32 %v1633, %v1554
        %v1635 = vadd.f32 %v1634, %v1556
        %v1636 = vadd.f32 %v1635, %v1558
        %v1637 = vrot.slane %v1636, 4
        %v1638 = vadd.f32 %v1636, %v1637
        %v1639 = vrot.slane %v1638, 2
        %v1640 = vadd.f32 %v1638, %v1639
        %v1641 = vrot.slane %v1640, 1
        %v1642 = vadd.f32 %v1640, %v1641
        %v1643 = vrcp.pop %v1579
        %v1644 = vmul.f32 1.0, %v1643
        %v1645 = vrcp.pop %v1600
        %v1646 = vmul.f32 1.0, %v1645
        %v1647 = vrcp.pop %v1621
        %v1648 = vmul.f32 1.0, %v1647
        %v1649 = vrcp.pop %v1642
        %v1650 = vmul.f32 1.0, %v1649
        %v1651 = vmul.f32 %v1432, %v1644
        %v1652 = vmul.f32 %v1434, %v1644
        %v1653 = vmul.f32 %v1436, %v1644
        %v1654 = vmul.f32 %v1438, %v1644
        %v1655 = vmul.f32 %v1440, %v1644
        %v1656 = vmul.f32 %v1442, %v1644
        %v1657 = vmul.f32 %v1444, %v1644
        %v1658 = vmul.f32 %v1446, %v1644
        %v1659 = vmul.f32 %v1448, %v1644
        %v1660 = vmul.f32 %v1450, %v1644
        %v1661 = vmul.f32 %v1452, %v1644
        %v1662 = vmul.f32 %v1454, %v1644
        %v1663 = vmul.f32 %v1456, %v1644
        %v1664 = vmul.f32 %v1458, %v1644
        %v1665 = vmul.f32 %v1460, %v1644
        %v1666 = vmul.f32 %v1462, %v1644
        %v1667 = vmul.f32 %v1464, %v1646
        %v1668 = vmul.f32 %v1466, %v1646
        %v1669 = vmul.f32 %v1468, %v1646
        %v1670 = vmul.f32 %v1470, %v1646
        %v1671 = vmul.f32 %v1472, %v1646
        %v1672 = vmul.f32 %v1474, %v1646
        %v1673 = vmul.f32 %v1476, %v1646
        %v1674 = vmul.f32 %v1478, %v1646
        %v1675 = vmul.f32 %v1480, %v1646
        %v1676 = vmul.f32 %v1482, %v1646
        %v1677 = vmul.f32 %v1484, %v1646
        %v1678 = vmul.f32 %v1486, %v1646
        %v1679 = vmul.f32 %v1488, %v1646
        %v1680 = vmul.f32 %v1490, %v1646
        %v1681 = vmul.f32 %v1492, %v1646
        %v1682 = vmul.f32 %v1494, %v1646
        %v1683 = vmul.f32 %v1496, %v1648
        %v1684 = vmul.f32 %v1498, %v1648
        %v1685 = vmul.f32 %v1500, %v1648
        %v1686 = vmul.f32 %v1502, %v1648
        %v1687 = vmul.f32 %v1504, %v1648
        %v1688 = vmul.f32 %v1506, %v1648
        %v1689 = vmul.f32 %v1508, %v1648
        %v1690 = vmul.f32 %v1510, %v1648
        %v1691 = vmul.f32 %v1512, %v1648
        %v1692 = vmul.f32 %v1514, %v1648
        %v1693 = vmul.f32 %v1516, %v1648
        %v1694 = vmul.f32 %v1518, %v1648
        %v1695 = vmul.f32 %v1520, %v1648
        %v1696 = vmul.f32 %v1522, %v1648
        %v1697 = vmul.f32 %v1524, %v1648
        %v1698 = vmul.f32 %v1526, %v1648
        %v1699 = vmul.f32 %v1528, %v1650
        %v1700 = vmul.f32 %v1530, %v1650
        %v1701 = vmul.f32 %v1532, %v1650
        %v1702 = vmul.f32 %v1534, %v1650
        %v1703 = vmul.f32 %v1536, %v1650
        %v1704 = vmul.f32 %v1538, %v1650
        %v1705 = vmul.f32 %v1540, %v1650
        %v1706 = vmul.f32 %v1542, %v1650
        %v1707 = vmul.f32 %v1544, %v1650
        %v1708 = vmul.f32 %v1546, %v1650
        %v1709 = vmul.f32 %v1548, %v1650
        %v1710 = vmul.f32 %v1550, %v1650
        %v1711 = vmul.f32 %v1552, %v1650
        %v1712 = vmul.f32 %v1554, %v1650
        %v1713 = vmul.f32 %v1556, %v1650
        %v1714 = vmul.f32 %v1558, %v1650
        %1715 = vmatprep.subr.mxu0 0.0
        %1716 = vmatpush1.msra.mxu0 %v1666
        %1717 = vmatprep.subr.mxu0 0.0
        %1718 = vmatpush1.msra.mxu0 %v1665
        %1719 = vmatprep.subr.mxu0 0.0
        %1720 = vmatpush1.msra.mxu0 %v1664
        %1721 = vmatprep.subr.mxu0 0.0
        %1722 = vmatpush1.msra.mxu0 %v1663
        %1723 = vmatprep.subr.mxu0 0.0
        %1724 = vmatpush1.msra.mxu0 %v1662
        %1725 = vmatprep.subr.mxu0 0.0
        %1726 = vmatpush1.msra.mxu0 %v1661
        %1727 = vmatprep.subr.mxu0 0.0
        %1728 = vmatpush1.msra.mxu0 %v1660
        %1729 = vmatprep.subr.mxu0 0.0
        %1730 = vmatpush1.msra.mxu0 %v1659
        %1731 = vmatprep.subr.mxu0 0.0
        %1732 = vmatpush1.msra.mxu0 %v1658
        %1733 = vmatprep.subr.mxu0 0.0
        %1734 = vmatpush1.msra.mxu0 %v1657
        %1735 = vmatprep.subr.mxu0 0.0
        %1736 = vmatpush1.msra.mxu0 %v1656
        %1737 = vmatprep.subr.mxu0 0.0
        %1738 = vmatpush1.msra.mxu0 %v1655
        %1739 = vmatprep.subr.mxu0 0.0
        %1740 = vmatpush1.msra.mxu0 %v1654
        %1741 = vmatprep.subr.mxu0 0.0
        %1742 = vmatpush1.msra.mxu0 %v1653
        %1743 = vmatprep.subr.mxu0 0.0
        %1744 = vmatpush1.msra.mxu0 %v1652
        %1745 = vmatprep.subr.mxu0 0.0
        %1746 = vmatpush1.msra.mxu0 %v1651
        %1747 = vmatprep.subr.mxu0 0.0
        %1748 = vmatpush2.msra.mxu0 0.0
        %1749 = vmatprep.subr.mxu0 0.0
        %1750 = vmatpush2.msra.mxu0 0.0
        %1751 = vmatprep.subr.mxu0 0.0
        %1752 = vmatpush2.msra.mxu0 0.0
        %1753 = vmatprep.subr.mxu0 0.0
        %1754 = vmatpush2.msra.mxu0 0.0
        %1755 = vmatprep.subr.mxu0 0.0
        %1756 = vmatpush2.msra.mxu0 0.0
        %1757 = vmatprep.subr.mxu0 0.0
        %1758 = vmatpush2.msra.mxu0 0.0
        %1759 = vmatprep.subr.mxu0 0.0
        %1760 = vmatpush2.msra.mxu0 0.0
        %1761 = vmatprep.subr.mxu0 0.0
        %1762 = vmatpush2.msra.mxu0 0.0
        %1763 = vmatprep.subr.mxu0 0.0
        %1764 = vmatpush2.msra.mxu0 0.0
        %1765 = vmatprep.subr.mxu0 0.0
        %1766 = vmatpush2.msra.mxu0 0.0
        %1767 = vmatprep.subr.mxu0 0.0
        %1768 = vmatpush2.msra.mxu0 0.0
        %1769 = vmatprep.subr.mxu0 0.0
        %1770 = vmatpush2.msra.mxu0 0.0
        %1771 = vmatprep.subr.mxu0 0.0
        %1772 = vmatpush2.msra.mxu0 0.0
        %1773 = vmatprep.subr.mxu0 0.0
        %1774 = vmatpush2.msra.mxu0 0.0
        %1775 = vmatprep.subr.mxu0 0.0
        %1776 = vmatpush2.msra.mxu0 0.0
        %1777 = vmatprep.subr.mxu0 0.0
        %1778 = vmatpush2.msra.mxu0 0.0
        %1779 = vmatprep.mubr.f32.mxu0 0.0
        %1780 = vmatmul.mubr.f32.gmra.mxu0 %v366
        %v1781 = vpop.f32.mrf.mxu0
        %v1782 = vadd.f32 0.0, %v1781
        %v1783 = vpop.f32.mrf.mxu0
        %1784 = vmatprep.mubr.f32.mxu0 0.0
        %1785 = vmatmul.mubr.f32.gmra.mxu0 %v367
        %v1786 = vpop.f32.mrf.mxu0
        %v1787 = vadd.f32 0.0, %v1786
        %v1788 = vpop.f32.mrf.mxu0
        %1789 = vdwg.mxu0
        %1790 = vmatprep.subr.mxu0 0.0
        %1791 = vmatpush1.msra.mxu0 %v1682
        %1792 = vmatprep.subr.mxu0 0.0
        %1793 = vmatpush1.msra.mxu0 %v1681
        %1794 = vmatprep.subr.mxu0 0.0
        %1795 = vmatpush1.msra.mxu0 %v1680
        %1796 = vmatprep.subr.mxu0 0.0
        %1797 = vmatpush1.msra.mxu0 %v1679
        %1798 = vmatprep.subr.mxu0 0.0
        %1799 = vmatpush1.msra.mxu0 %v1678
        %1800 = vmatprep.subr.mxu0 0.0
        %1801 = vmatpush1.msra.mxu0 %v1677
        %1802 = vmatprep.subr.mxu0 0.0
        %1803 = vmatpush1.msra.mxu0 %v1676
        %1804 = vmatprep.subr.mxu0 0.0
        %1805 = vmatpush1.msra.mxu0 %v1675
        %1806 = vmatprep.subr.mxu0 0.0
        %1807 = vmatpush1.msra.mxu0 %v1674
        %1808 = vmatprep.subr.mxu0 0.0
        %1809 = vmatpush1.msra.mxu0 %v1673
        %1810 = vmatprep.subr.mxu0 0.0
        %1811 = vmatpush1.msra.mxu0 %v1672
        %1812 = vmatprep.subr.mxu0 0.0
        %1813 = vmatpush1.msra.mxu0 %v1671
        %1814 = vmatprep.subr.mxu0 0.0
        %1815 = vmatpush1.msra.mxu0 %v1670
        %1816 = vmatprep.subr.mxu0 0.0
        %1817 = vmatpush1.msra.mxu0 %v1669
        %1818 = vmatprep.subr.mxu0 0.0
        %1819 = vmatpush1.msra.mxu0 %v1668
        %1820 = vmatprep.subr.mxu0 0.0
        %1821 = vmatpush1.msra.mxu0 %v1667
        %1822 = vmatprep.subr.mxu0 0.0
        %1823 = vmatpush2.msra.mxu0 0.0
        %1824 = vmatprep.subr.mxu0 0.0
        %1825 = vmatpush2.msra.mxu0 0.0
        %1826 = vmatprep.subr.mxu0 0.0
        %1827 = vmatpush2.msra.mxu0 0.0
        %1828 = vmatprep.subr.mxu0 0.0
        %1829 = vmatpush2.msra.mxu0 0.0
        %1830 = vmatprep.subr.mxu0 0.0
        %1831 = vmatpush2.msra.mxu0 0.0
        %1832 = vmatprep.subr.mxu0 0.0
        %1833 = vmatpush2.msra.mxu0 0.0
        %1834 = vmatprep.subr.mxu0 0.0
        %1835 = vmatpush2.msra.mxu0 0.0
        %1836 = vmatprep.subr.mxu0 0.0
        %1837 = vmatpush2.msra.mxu0 0.0
        %1838 = vmatprep.subr.mxu0 0.0
        %1839 = vmatpush2.msra.mxu0 0.0
        %1840 = vmatprep.subr.mxu0 0.0
        %1841 = vmatpush2.msra.mxu0 0.0
        %1842 = vmatprep.subr.mxu0 0.0
        %1843 = vmatpush2.msra.mxu0 0.0
        %1844 = vmatprep.subr.mxu0 0.0
        %1845 = vmatpush2.msra.mxu0 0.0
        %1846 = vmatprep.subr.mxu0 0.0
        %1847 = vmatpush2.msra.mxu0 0.0
        %1848 = vmatprep.subr.mxu0 0.0
        %1849 = vmatpush2.msra.mxu0 0.0
        %1850 = vmatprep.subr.mxu0 0.0
        %1851 = vmatpush2.msra.mxu0 0.0
        %1852 = vmatprep.subr.mxu0 0.0
        %1853 = vmatpush2.msra.mxu0 0.0
        %1854 = vmatprep.mubr.f32.mxu0 0.0
        %1855 = vmatmul.mubr.f32.gmra.mxu0 %v368
        %v1856 = vpop.f32.mrf.mxu0
        %v1857 = vadd.f32 0.0, %v1856
        %v1858 = vpop.f32.mrf.mxu0
        %1859 = vmatprep.mubr.f32.mxu0 0.0
        %1860 = vmatmul.mubr.f32.gmra.mxu0 %v369
        %v1861 = vpop.f32.mrf.mxu0
        %v1862 = vadd.f32 0.0, %v1861
        %v1863 = vpop.f32.mrf.mxu0
        %1864 = vdwg.mxu0
        %1865 = vmatprep.subr.mxu0 0.0
        %1866 = vmatpush1.msra.mxu0 %v1698
        %1867 = vmatprep.subr.mxu0 0.0
        %1868 = vmatpush1.msra.mxu0 %v1697
        %1869 = vmatprep.subr.mxu0 0.0
        %1870 = vmatpush1.msra.mxu0 %v1696
        %1871 = vmatprep.subr.mxu0 0.0
        %1872 = vmatpush1.msra.mxu0 %v1695
        %1873 = vmatprep.subr.mxu0 0.0
        %1874 = vmatpush1.msra.mxu0 %v1694
        %1875 = vmatprep.subr.mxu0 0.0
        %1876 = vmatpush1.msra.mxu0 %v1693
        %1877 = vmatprep.subr.mxu0 0.0
        %1878 = vmatpush1.msra.mxu0 %v1692
        %1879 = vmatprep.subr.mxu0 0.0
        %1880 = vmatpush1.msra.mxu0 %v1691
        %1881 = vmatprep.subr.mxu0 0.0
        %1882 = vmatpush1.msra.mxu0 %v1690
        %1883 = vmatprep.subr.mxu0 0.0
        %1884 = vmatpush1.msra.mxu0 %v1689
        %1885 = vmatprep.subr.mxu0 0.0
        %1886 = vmatpush1.msra.mxu0 %v1688
        %1887 = vmatprep.subr.mxu0 0.0
        %1888 = vmatpush1.msra.mxu0 %v1687
        %1889 = vmatprep.subr.mxu0 0.0
        %1890 = vmatpush1.msra.mxu0 %v1686
        %1891 = vmatprep.subr.mxu0 0.0
        %1892 = vmatpush1.msra.mxu0 %v1685
        %1893 = vmatprep.subr.mxu0 0.0
        %1894 = vmatpush1.msra.mxu0 %v1684
        %1895 = vmatprep.subr.mxu0 0.0
        %1896 = vmatpush1.msra.mxu0 %v1683
        %1897 = vmatprep.subr.mxu0 0.0
        %1898 = vmatpush2.msra.mxu0 0.0
        %1899 = vmatprep.subr.mxu0 0.0
        %1900 = vmatpush2.msra.mxu0 0.0
        %1901 = vmatprep.subr.mxu0 0.0
        %1902 = vmatpush2.msra.mxu0 0.0
        %1903 = vmatprep.subr.mxu0 0.0
        %1904 = vmatpush2.msra.mxu0 0.0
        %1905 = vmatprep.subr.mxu0 0.0
        %1906 = vmatpush2.msra.mxu0 0.0
        %1907 = vmatprep.subr.mxu0 0.0
        %1908 = vmatpush2.msra.mxu0 0.0
        %1909 = vmatprep.subr.mxu0 0.0
        %1910 = vmatpush2.msra.mxu0 0.0
        %1911 = vmatprep.subr.mxu0 0.0
        %1912 = vmatpush2.msra.mxu0 0.0
        %1913 = vmatprep.subr.mxu0 0.0
        %1914 = vmatpush2.msra.mxu0 0.0
        %1915 = vmatprep.subr.mxu0 0.0
        %1916 = vmatpush2.msra.mxu0 0.0
        %1917 = vmatprep.subr.mxu0 0.0
        %1918 = vmatpush2.msra.mxu0 0.0
        %1919 = vmatprep.subr.mxu0 0.0
        %1920 = vmatpush2.msra.mxu0 0.0
        %1921 = vmatprep.subr.mxu0 0.0
        %1922 = vmatpush2.msra.mxu0 0.0
        %1923 = vmatprep.subr.mxu0 0.0
        %1924 = vmatpush2.msra.mxu0 0.0
        %1925 = vmatprep.subr.mxu0 0.0
        %1926 = vmatpush2.msra.mxu0 0.0
        %1927 = vmatprep.subr.mxu0 0.0
        %1928 = vmatpush2.msra.mxu0 0.0
        %1929 = vmatprep.mubr.f32.mxu0 0.0
        %1930 = vmatmul.mubr.f32.gmra.mxu0 %v370
        %v1931 = vpop.f32.mrf.mxu0
        %v1932 = vadd.f32 0.0, %v1931
        %v1933 = vpop.f32.mrf.mxu0
        %1934 = vmatprep.mubr.f32.mxu0 0.0
        %1935 = vmatmul.mubr.f32.gmra.mxu0 %v371
        %v1936 = vpop.f32.mrf.mxu0
        %v1937 = vadd.f32 0.0, %v1936
        %v1938 = vpop.f32.mrf.mxu0
        %1939 = vdwg.mxu0
        %1940 = vmatprep.subr.mxu0 0.0
        %1941 = vmatpush1.msra.mxu0 %v1714
        %1942 = vmatprep.subr.mxu0 0.0
        %1943 = vmatpush1.msra.mxu0 %v1713
        %1944 = vmatprep.subr.mxu0 0.0
        %1945 = vmatpush1.msra.mxu0 %v1712
        %1946 = vmatprep.subr.mxu0 0.0
        %1947 = vmatpush1.msra.mxu0 %v1711
        %1948 = vmatprep.subr.mxu0 0.0
        %1949 = vmatpush1.msra.mxu0 %v1710
        %1950 = vmatprep.subr.mxu0 0.0
        %1951 = vmatpush1.msra.mxu0 %v1709
        %1952 = vmatprep.subr.mxu0 0.0
        %1953 = vmatpush1.msra.mxu0 %v1708
        %1954 = vmatprep.subr.mxu0 0.0
        %1955 = vmatpush1.msra.mxu0 %v1707
        %1956 = vmatprep.subr.mxu0 0.0
        %1957 = vmatpush1.msra.mxu0 %v1706
        %1958 = vmatprep.subr.mxu0 0.0
        %1959 = vmatpush1.msra.mxu0 %v1705
        %1960 = vmatprep.subr.mxu0 0.0
        %1961 = vmatpush1.msra.mxu0 %v1704
        %1962 = vmatprep.subr.mxu0 0.0
        %1963 = vmatpush1.msra.mxu0 %v1703
        %1964 = vmatprep.subr.mxu0 0.0
        %1965 = vmatpush1.msra.mxu0 %v1702
        %1966 = vmatprep.subr.mxu0 0.0
        %1967 = vmatpush1.msra.mxu0 %v1701
        %1968 = vmatprep.subr.mxu0 0.0
        %1969 = vmatpush1.msra.mxu0 %v1700
        %1970 = vmatprep.subr.mxu0 0.0
        %1971 = vmatpush1.msra.mxu0 %v1699
        %1972 = vmatprep.subr.mxu0 0.0
        %1973 = vmatpush2.msra.mxu0 0.0
        %1974 = vmatprep.subr.mxu0 0.0
        %1975 = vmatpush2.msra.mxu0 0.0
        %1976 = vmatprep.subr.mxu0 0.0
        %1977 = vmatpush2.msra.mxu0 0.0
        %1978 = vmatprep.subr.mxu0 0.0
        %1979 = vmatpush2.msra.mxu0 0.0
        %1980 = vmatprep.subr.mxu0 0.0
        %1981 = vmatpush2.msra.mxu0 0.0
        %1982 = vmatprep.subr.mxu0 0.0
        %1983 = vmatpush2.msra.mxu0 0.0
        %1984 = vmatprep.subr.mxu0 0.0
        %1985 = vmatpush2.msra.mxu0 0.0
        %1986 = vmatprep.subr.mxu0 0.0
        %1987 = vmatpush2.msra.mxu0 0.0
        %1988 = vmatprep.subr.mxu0 0.0
        %1989 = vmatpush2.msra.mxu0 0.0
        %1990 = vmatprep.subr.mxu0 0.0
        %1991 = vmatpush2.msra.mxu0 0.0
        %1992 = vmatprep.subr.mxu0 0.0
        %1993 = vmatpush2.msra.mxu0 0.0
        %1994 = vmatprep.subr.mxu0 0.0
        %1995 = vmatpush2.msra.mxu0 0.0
        %1996 = vmatprep.subr.mxu0 0.0
        %1997 = vmatpush2.msra.mxu0 0.0
        %1998 = vmatprep.subr.mxu0 0.0
        %1999 = vmatpush2.msra.mxu0 0.0
        %2000 = vmatprep.subr.mxu0 0.0
        %2001 = vmatpush2.msra.mxu0 0.0
        %2002 = vmatprep.subr.mxu0 0.0
        %2003 = vmatpush2.msra.mxu0 0.0
        %2004 = vmatprep.mubr.f32.mxu0 0.0
        %2005 = vmatmul.mubr.f32.gmra.mxu0 %v372
        %v2006 = vpop.f32.mrf.mxu0
        %v2007 = vadd.f32 0.0, %v2006
        %v2008 = vpop.f32.mrf.mxu0
        %2009 = vmatprep.mubr.f32.mxu0 0.0
        %2010 = vmatmul.mubr.f32.gmra.mxu0 %v373
        %v2011 = vpop.f32.mrf.mxu0
        %v2012 = vadd.f32 0.0, %v2011
        %v2013 = vpop.f32.mrf.mxu0
        %2014 = vdwg.mxu0
        %2015 = vst [vmem:[%s345] sm:$0xff] %v1782
        %2016 = vst [vmem:[%s345 + $0x8] sm:$0xff] %v1787
        %2017 = vst [vmem:[%s345 + $0x10] sm:$0xff] %v1857
        %2018 = vst [vmem:[%s345 + $0x18] sm:$0xff] %v1862
        %2019 = vst [vmem:[%s345 + $0x20] sm:$0xff] %v1932
        %2020 = vst [vmem:[%s345 + $0x28] sm:$0xff] %v1937
        %2021 = vst [vmem:[%s345 + $0x30] sm:$0xff] %v2007
        %2022 = vst [vmem:[%s345 + $0x38] sm:$0xff] %v2012
        %s2023 = sand.u32 %s109, 1
        %s2024 = scalar_lea.sflag [#allocation4], %s2023
        %s2025 = sand.u32 %s109, 1
        %s2026 = smul.addr %s2025, 64
        %s2027 = scalar_lea.vmem [#allocation8], %s2026
        // Predicated region
        $region45: #{tpu_custom_call.1} parent=31 // pred_check
          %p2028 = pneg %p119
        $region46: #{tpu_custom_call.1} parent=31 // pred_check_branch
          %2030 = sbr.rel (%p2028) target = $region48
        $region47: #{tpu_custom_call.1} parent=31 // pred_region
          %s2031 = smul.u32 4, %s23
          %s2033 = ssub.s32 1024, 1024
          %2034 = vsyncadd %s2024, %s2033
          %s2035 = smul.addr %s2031, 2
          %s2036 = smul.addr %s2035, 128
          %s2037 = scalar_lea.hbm %s3, %s2036
          %s2038 = sshll.u32 %s2027, 4
          %s2039 = int_to_ptr.vmem [resolvable:$true] %s2038
          %2044 = dma.vmem_to_hbm [thread:$0]  %s2039, 1024, %s2037, %s2024, 128, 128, 8
        $region48: #{tpu_custom_call.1} parent=31 // pred_fallthru
          _
      $region32: #{tpu_custom_call.1} parent=5 // pred_fallthru
        _
      %p2045 = scmp.le.s32.totalorder 2, %s18
      // Predicated region
      $region49: #{tpu_custom_call.1} parent=5 // pred_check
        %p2046 = pneg %p2045
      $region50: #{tpu_custom_call.1} parent=5 // pred_check_branch
        %2048 = sbr.rel (%p2046) target = $region52
      $region51: #{tpu_custom_call.1} parent=5 // pred_region
        %s2049 = ssub.s32 %s18, 2
        // Predicated region
        $region53: #{tpu_custom_call.1} parent=51 // pred_check
          %p2050 = pneg %p125
        $region54: #{tpu_custom_call.1} parent=51 // pred_check_branch
          %2052 = sbr.rel (%p2050) target = $region56
        $region55: #{tpu_custom_call.1} parent=51 // pred_region
          %s2053 = sand.u32 %s110, 1
          %s2054 = scalar_lea.sflag [#allocation4], %s2053
          %s2055 = sand.u32 %s110, 1
          %s2056 = smul.addr %s2055, 64
          %s2057 = scalar_lea.vmem [#allocation8], %s2056
          %2058 = dma.done %s2054, 1024
        $region56: #{tpu_custom_call.1} parent=51 // pred_fallthru
          _
      $region52: #{tpu_custom_call.1} parent=5 // pred_fallthru
        _
    $region6: #{tpu_custom_call.1} parent=1 // loop_footer
      %s22 = sadd.s32 1, %s18
    $region7: #{tpu_custom_call.1} parent=1 // loop_footer_branch
      %17 = sbr.rel target = $region3
    $region8: #{tpu_custom_call.1} parent=1 // loop_exit
      _
    %2059 = vsyncpa [#allocation3], 1
    %s2060 = scalar_lea.sflag [#allocation3], 1
    %2061 = vsyncpa %s2060, 1
    %2062 = vsyncpa [#allocation6], 1
    %s2063 = scalar_lea.sflag [#allocation6], 1
    %2064 = vsyncpa %s2063, 1
    %2065 = vsyncpa [#allocation4], 1
    %s2066 = scalar_lea.sflag [#allocation4], 1
    %2067 = vsyncpa %s2066, 1

</llo_original>
